<compile_context>
chip_gen: v5e
topology: v5e:2x2
jax: 0.10.0
libtpu: 0.0.40
codegen_flags: <defaults>
</compile_context>

<pallas_src>
import numpy as np
import jax
import jax.numpy as jnp
from jax import lax
from jax.experimental import pallas as pl
from jax.experimental.pallas import tpu as pltpu


# ----------------------------- Pallas kernel -----------------------------

def _fused_kernel(x_ref, t1_ref, b1t_ref, t2_ref, b2t_ref,
                  w1k_ref, fb1_ref, w2k_ref, fb2_ref, o_ref,
                  s1, s1p, s2, s2f):
    """Whole NetSynthetic forward for one batch block (all matmuls on MXU).

    Activation layouts (lane dims padded to 128, pad lanes hold finite zeros):
      conv1: rows (b, y1) y1<24, lanes c*24 + x1   (x1<24, lanes 120..127 pad)
      conv2: rows (b, y2) y2<8,  lanes c2*8 + x2   (x2<8,  lanes  80..127 pad)
    """
    bb = x_ref.shape[0]
    bf16 = jnp.bfloat16
    f32 = jnp.float32

    # ---- conv1 (1->5, k5, valid) + bias + relu ---------------------------
    r1 = None
    for dy in range(5):
        lhs = x_ref[:, pl.ds(dy, 24), :].reshape(bb * 24, 28).astype(bf16)
        term = jnp.dot(lhs, t1_ref[dy], preferred_element_type=f32)
        r1 = term if r1 is None else r1 + term
    act1 = jnp.maximum(r1 + b1t_ref[...], 0.0)                  # (bb*24, 128)

    # ---- pool1, width half: max with lane+1 neighbour (full 128 lanes so
    # the scratch store is unmasked; the wraparound lane is never selected) --
    nxt1 = jnp.concatenate([act1[:, 1:], act1[:, :1]], axis=-1)
    s1[...] = jnp.maximum(act1, nxt1).reshape(bb, 24, 128)

    # ---- pool1, height half: computed once into a pooled scratch ---------
    ev1 = s1[:, pl.ds(0, 12, 2), :]
    od1 = s1[:, pl.ds(1, 12, 2), :]
    s1p[...] = jnp.maximum(ev1, od1)                            # (bb, 12, 128)

    # ---- conv2 (5->10, k5, valid): contiguous row windows of s1p ---------
    r2 = None
    for dy in range(5):
        chunk = s1p[:, pl.ds(dy, 8), :].reshape(bb * 8, 128).astype(bf16)
        term = jnp.dot(chunk, t2_ref[dy], preferred_element_type=f32)
        r2 = term if r2 is None else r2 + term
    act2 = jnp.maximum(r2 + b2t_ref[...], 0.0)                  # (bb*8, 128)

    # ---- pool2, width half ------------------------------------------------
    nxt2 = jnp.concatenate([act2[:, 1:], act2[:, :1]], axis=-1)
    s2[...] = jnp.maximum(act2, nxt2).reshape(bb, 8, 128)

    # ---- pool2, height half + flatten -> one K=512 fc1 matmul -------------
    pooled = jnp.maximum(s2[:, pl.ds(0, 4, 2), :],
                         s2[:, pl.ds(1, 4, 2), :])              # (bb, 4, 128)
    for h2 in range(4):                                         # lane-aligned packing
        s2f[:, pl.ds(h2 * 128, 128)] = pooled[:, h2, :]
    h = jnp.dot(s2f[...].astype(bf16), w1k_ref[...],
                preferred_element_type=f32)
    h = jnp.maximum(h + fb1_ref[...], 0.0)                      # (bb, 512)

    # ---- fc2 (tiny, kept f32) + log_softmax -------------------------------
    logits = jnp.dot(h, w2k_ref[...],
                     preferred_element_type=f32) + fb2_ref[...]
    m = jnp.max(logits, axis=-1, keepdims=True)
    lse = jnp.log(jnp.sum(jnp.exp(logits - m), axis=-1, keepdims=True)) + m
    o_ref[...] = logits - lse


# ----------------------------- host-side glue -----------------------------

def init_params(key):
    """Deterministic parameter init in PyTorch layout conventions."""
    ks = jax.random.split(key, 8)
    p = {}
    p["conv1_w"] = 0.2 * jax.random.normal(ks[0], (5, 1, 5, 5), jnp.float32)   # (O,I,kh,kw)
    p["conv1_b"] = 0.1 * jax.random.normal(ks[1], (5,), jnp.float32)
    p["conv2_w"] = 0.1 * jax.random.normal(ks[2], (10, 5, 5, 5), jnp.float32)
    p["conv2_b"] = 0.1 * jax.random.normal(ks[3], (10,), jnp.float32)
    p["fc1_w"] = 0.05 * jax.random.normal(ks[4], (500, 160), jnp.float32)      # (out,in)
    p["fc1_b"] = 0.05 * jax.random.normal(ks[5], (500,), jnp.float32)
    p["fc2_w"] = 0.05 * jax.random.normal(ks[6], (10, 500), jnp.float32)
    p["fc2_b"] = 0.05 * jax.random.normal(ks[7], (10,), jnp.float32)
    return p


def prep_kernel_params(p):
    """Precompute lowered-conv (Toeplitz) / packed FC weights on the host.

    Lane-selection invariant (pool fusion): after the width pool, valid pooled
    conv1 values live only at lanes c*24 + 2*w1 (w1<12) and valid pooled conv2
    values only at lanes c2*8 + 2*w2 (w2<4).  t2 / w1k may only have nonzero
    rows at those lanes (asserted below), so contaminated / padded lanes never
    contribute to any matmul.
    """
    w1 = np.asarray(p["conv1_w"], np.float32)      # (5, 1, 5, 5)  (oc, ic, kh, kw)
    b1 = np.asarray(p["conv1_b"], np.float32)
    w2 = np.asarray(p["conv2_w"], np.float32)      # (10, 5, 5, 5)
    b2 = np.asarray(p["conv2_b"], np.float32)
    fw1 = np.asarray(p["fc1_w"], np.float32)       # (500, 160)
    fb1 = np.asarray(p["fc1_b"], np.float32)
    fw2 = np.asarray(p["fc2_w"], np.float32)       # (10, 500)
    fb2 = np.asarray(p["fc2_b"], np.float32)

    # conv1: r1[(b,y1), c*24+x1] = sum_dy  img[b, y1+dy, :] @ t1[dy]
    t1 = np.zeros((5, 28, 128), np.float32)
    for dy in range(5):
        for c in range(5):
            for x in range(24):
                for dx in range(5):
                    t1[dy, x + dx, c * 24 + x] = w1[c, 0, dy, dx]
    b1t = np.zeros((1, 128), np.float32)
    b1t[0, :120] = np.repeat(b1, 24)

    # conv2 consumes the width-then-height pooled conv1 activations: the
    # pooled value for pool-column w1 of channel ic lives at lane ic*24 + 2*w1.
    t2 = np.zeros((5, 128, 128), np.float32)
    for dy in range(5):
        for c2 in range(10):
            for ic in range(5):
                for x2 in range(8):
                    for dx in range(5):
                        t2[dy, ic * 24 + 2 * (x2 + dx), c2 * 8 + x2] = w2[c2, ic, dy, dx]
    b2t = np.zeros((1, 128), np.float32)
    b2t[0, :80] = np.repeat(b2, 8)

    # fc1 (merged K=512): row h2*128 + (c2*8 + 2*w2) <- fc1 feature c2*16+h2*4+w2
    # (PyTorch flattens NCHW), output padded 500 -> 512.
    w1k = np.zeros((512, 512), np.float32)
    for h2 in range(4):
        for c2 in range(10):
            for w2i in range(4):
                w1k[h2 * 128 + c2 * 8 + 2 * w2i, :500] = fw1[:, c2 * 16 + h2 * 4 + w2i]
    fb1k = np.zeros((1, 512), np.float32)
    fb1k[0, :500] = fb1

    w2k = np.zeros((512, 10), np.float32)
    w2k[:500, :] = fw2.T
    fb2k = fb2[None, :]

    # --- assert the lane-selection invariant (only valid pooled lanes used) ---
    valid1 = np.zeros(128, bool)
    for c in range(5):
        for w in range(12):
            valid1[c * 24 + 2 * w] = True
    assert not np.any(t2[:, ~valid1, :]), "t2 selects a non-pooled lane"
    valid2 = np.zeros(512, bool)
    for h2 in range(4):
        for c2 in range(10):
            for w in range(4):
                valid2[h2 * 128 + c2 * 8 + 2 * w] = True
    assert not np.any(w1k[~valid2, :]), "w1k selects a non-pooled lane"

    return dict(t1=jnp.asarray(t1, jnp.bfloat16),
                b1t=jnp.asarray(b1t),
                t2=jnp.asarray(t2, jnp.bfloat16),
                b2t=jnp.asarray(b2t),
                w1k=jnp.asarray(w1k, jnp.bfloat16),
                fb1=jnp.asarray(fb1k),
                w2k=jnp.asarray(w2k),            # fc2 kept f32 (tiny)
                fb2=jnp.asarray(fb2k))


def _choose_block(n):
    """Pick (block_batch, padded_batch): block is a multiple of 8, <=256, and
    the grid keeps >=2 steps whenever the batch allows (v7x has 2 TCs)."""
    if n <= 8:
        return n, n
    bb = min(256, max(8, ((n // 2) // 8) * 8))
    n_pad = ((n + bb - 1) // bb) * bb
    return bb, n_pad


def _cost_estimate(n):
    flops_per = (5 * 2 * 24 * 28 * 128      # conv1 Toeplitz matmuls
                 + 5 * 2 * 8 * 128 * 128    # conv2 Toeplitz matmuls
                 + 2 * 512 * 512            # fc1 (merged)
                 + 2 * 512 * 10)            # fc2
    weight_bytes = (2 * (5 * 28 * 128 + 5 * 128 * 128 + 512 * 512)   # bf16
                    + 4 * (128 + 128 + 512 + 512 * 10 + 10))         # f32
    return pl.CostEstimate(flops=n * flops_per,
                           transcendentals=n * 11,
                           bytes_accessed=n * (28 * 28 * 4 + 10 * 4) + weight_bytes)


@jax.jit
def net_synthetic_forward(x_nchw, kp):
    n = x_nchw.shape[0]
    assert x_nchw.shape[1:] == (1, 28, 28), x_nchw.shape
    bb, n_pad = _choose_block(n)
    x = x_nchw.reshape(n, 28, 28).astype(jnp.float32)     # drop the single channel
    if n_pad != n:
        x = jnp.pad(x, ((0, n_pad - n), (0, 0), (0, 0)))

    out = pl.pallas_call(
        _fused_kernel,
        grid=(n_pad // bb,),
        in_specs=[
            pl.BlockSpec((bb, 28, 28), lambda b: (b, 0, 0)),     # images (f32)
            pl.BlockSpec((5, 28, 128), lambda b: (0, 0, 0)),     # conv1 Toeplitz (bf16)
            pl.BlockSpec((1, 128), lambda b: (0, 0)),            # conv1 bias (tiled)
            pl.BlockSpec((5, 128, 128), lambda b: (0, 0, 0)),    # conv2 Toeplitz (bf16)
            pl.BlockSpec((1, 128), lambda b: (0, 0)),            # conv2 bias (tiled)
            pl.BlockSpec((512, 512), lambda b: (0, 0)),          # fc1 packed (bf16)
            pl.BlockSpec((1, 512), lambda b: (0, 0)),            # fc1 bias
            pl.BlockSpec((512, 10), lambda b: (0, 0)),           # fc2 weights (f32)
            pl.BlockSpec((1, 10), lambda b: (0, 0)),             # fc2 bias
        ],
        out_specs=pl.BlockSpec((bb, 10), lambda b: (b, 0)),
        out_shape=jax.ShapeDtypeStruct((n_pad, 10), jnp.float32),
        scratch_shapes=[
            pltpu.VMEM((bb, 24, 128), jnp.float32),   # width-pooled conv1 acts
            pltpu.VMEM((bb, 12, 128), jnp.float32),   # fully pooled conv1 acts
            pltpu.VMEM((bb, 8, 128), jnp.float32),    # width-pooled conv2 acts
            pltpu.VMEM((bb, 512), jnp.float32),       # packed fc1 operand
        ],
        compiler_params=pltpu.CompilerParams(
            dimension_semantics=("parallel",),
            vmem_limit_bytes=48 * 1024 * 1024),
        cost_estimate=_cost_estimate(n_pad),
    )(x, kp["t1"], kp["b1t"], kp["t2"], kp["b2t"],
      kp["w1k"], kp["fb1"], kp["w2k"], kp["fb2"])
    return out[:n]


def reference_forward(x, p):
    """Pure-JAX reference mirroring the PyTorch forward exactly (NCHW, f32)."""
    n = x.shape[0]
    dn = ("NCHW", "OIHW", "NCHW")
    hp = lax.Precision.HIGHEST
    y = lax.conv_general_dilated(x, p["conv1_w"], (1, 1), "VALID",
                                 dimension_numbers=dn, precision=hp)
    y = jnp.maximum(y + p["conv1_b"][None, :, None, None], 0.0)
    y = y.reshape(n, 5, 12, 2, 12, 2).max(axis=(3, 5))
    y = lax.conv_general_dilated(y, p["conv2_w"], (1, 1), "VALID",
                                 dimension_numbers=dn, precision=hp)
    y = jnp.maximum(y + p["conv2_b"][None, :, None, None], 0.0)
    y = y.reshape(n, 10, 4, 2, 4, 2).max(axis=(3, 5))
    f = y.reshape(n, 4 * 4 * 10)
    h = jnp.maximum(jnp.dot(f, p["fc1_w"].T, precision=hp) + p["fc1_b"], 0.0)
    logits = jnp.dot(h, p["fc2_w"].T, precision=hp) + p["fc2_b"]
    return jax.nn.log_softmax(logits, axis=1)


if __name__ == "__main__":
    key = jax.random.PRNGKey(0)
    k_x1, k_x2, k_p = jax.random.split(key, 3)

    params = init_params(k_p)
    kparams = prep_kernel_params(params)

    # Kernel uses bf16 matmul operands (f32 accumulate / element-wise) while the
    # reference is all-f32 HIGHEST precision -> use a bf16-appropriate tolerance.
    atol = rtol = 2.5e-2

    # batch=2, single channel, 28x28 (so the flatten is 4*4*10 = 160); bb == n.
    x = jax.random.normal(k_x1, (2, 1, 28, 28), jnp.float32)
    out = jax.block_until_ready(net_synthetic_forward(x, kparams))
    ref = jax.block_until_ready(reference_forward(x, params))
    assert out.shape == (2, 10), out.shape
    if not bool(jnp.allclose(out, ref, atol=atol, rtol=rtol)):
        err = float(jnp.max(jnp.abs(out - ref)))
        raise AssertionError(f"small-batch mismatch vs reference, max abs err = {err}")

    # batch=20 (not a multiple of 8) exercises host padding + a multi-step grid.
    x2 = jax.random.normal(k_x2, (20, 1, 28, 28), jnp.float32)
    out2 = jax.block_until_ready(net_synthetic_forward(x2, kparams))
    ref2 = jax.block_until_ready(reference_forward(x2, params))
    assert out2.shape == (20, 10), out2.shape
    if not bool(jnp.allclose(out2, ref2, atol=atol, rtol=rtol)):
        err = float(jnp.max(jnp.abs(out2 - ref2)))
        raise AssertionError(f"batch-20 mismatch vs reference, max abs err = {err}")

    print("KERNEL_OK")
</pallas_src>

<mosaic_0001>
module attributes {stable_mosaic.version = 11 : i64} {
  func.func @_fused_kernel(%arg0: i32, %arg1: memref<2x28x28xf32, #tpu.memory_space<vmem>>, %arg2: memref<5x28x128xbf16, #tpu.memory_space<vmem>>, %arg3: memref<1x128xf32, #tpu.memory_space<vmem>>, %arg4: memref<5x128x128xbf16, #tpu.memory_space<vmem>>, %arg5: memref<1x128xf32, #tpu.memory_space<vmem>>, %arg6: memref<512x512xbf16, #tpu.memory_space<vmem>>, %arg7: memref<1x512xf32, #tpu.memory_space<vmem>>, %arg8: memref<512x10xf32, #tpu.memory_space<vmem>>, %arg9: memref<1x10xf32, #tpu.memory_space<vmem>>, %arg10: memref<2x10xf32, #tpu.memory_space<vmem>>, %arg11: memref<2x24x128xf32, #tpu.memory_space<vmem>>, %arg12: memref<2x12x128xf32, #tpu.memory_space<vmem>>, %arg13: memref<2x8x128xf32, #tpu.memory_space<vmem>>, %arg14: memref<2x512xf32, #tpu.memory_space<vmem>>) attributes {dimension_semantics = [#tpu.dimension_semantics<parallel>], iteration_bounds = array<i64: 1>, scalar_prefetch = 0 : i64, scratch_operands = 4 : i64, tpu.core_type = #tpu.core_type<tc>, window_params = [{transform_indices = @transform_0, window_bounds = array<i64: 2, 28, 28>}, {pipeline_mode = #tpu.pipeline_mode<synchronous>, transform_indices = @transform_1, window_bounds = array<i64: 5, 28, 128>}, {pipeline_mode = #tpu.pipeline_mode<synchronous>, transform_indices = @transform_2, window_bounds = array<i64: 1, 128>}, {pipeline_mode = #tpu.pipeline_mode<synchronous>, transform_indices = @transform_3, window_bounds = array<i64: 5, 128, 128>}, {pipeline_mode = #tpu.pipeline_mode<synchronous>, transform_indices = @transform_4, window_bounds = array<i64: 1, 128>}, {pipeline_mode = #tpu.pipeline_mode<synchronous>, transform_indices = @transform_5, window_bounds = array<i64: 512, 512>}, {pipeline_mode = #tpu.pipeline_mode<synchronous>, transform_indices = @transform_6, window_bounds = array<i64: 1, 512>}, {pipeline_mode = #tpu.pipeline_mode<synchronous>, transform_indices = @transform_7, window_bounds = array<i64: 512, 10>}, {pipeline_mode = #tpu.pipeline_mode<synchronous>, transform_indices = @transform_8, window_bounds = array<i64: 1, 10>}, {transform_indices = @transform_9, window_bounds = array<i64: 2, 10>}]} {
    %c0 = arith.constant 0 : index
    %c0_0 = arith.constant 0 : index
    %c0_1 = arith.constant 0 : index
    %0 = vector.load %arg1[%c0, %c0_0, %c0_1] : memref<2x28x28xf32, #tpu.memory_space<vmem>>, vector<2x24x28xf32>
    %1 = vector.shape_cast %0 : vector<2x24x28xf32> to vector<48x28xf32>
    %2 = arith.truncf %1 : vector<48x28xf32> to vector<48x28xbf16>
    %c0_2 = arith.constant 0 : index
    %c0_3 = arith.constant 0 : index
    %c0_4 = arith.constant 0 : index
    %3 = vector.load %arg2[%c0_2, %c0_3, %c0_4] : memref<5x28x128xbf16, #tpu.memory_space<vmem>>, vector<1x28x128xbf16>
    %4 = vector.shape_cast %3 : vector<1x28x128xbf16> to vector<28x128xbf16>
    %cst = arith.constant dense<0.000000e+00> : vector<48x128xf32>
    %5 = tpu.matmul %2, %4, %cst {dimension_numbers = #tpu.dot_dimension_numbers<[1], [0], [0], [1], [0, 0, 1, 1], [], []>} : vector<48x28xbf16>, vector<28x128xbf16>, vector<48x128xf32> -> vector<48x128xf32>
    %c0_5 = arith.constant 0 : index
    %c1 = arith.constant 1 : index
    %c0_6 = arith.constant 0 : index
    %6 = vector.load %arg1[%c0_5, %c1, %c0_6] : memref<2x28x28xf32, #tpu.memory_space<vmem>>, vector<2x24x28xf32>
    %7 = vector.shape_cast %6 : vector<2x24x28xf32> to vector<48x28xf32>
    %8 = arith.truncf %7 : vector<48x28xf32> to vector<48x28xbf16>
    %c1_7 = arith.constant 1 : index
    %c0_8 = arith.constant 0 : index
    %c0_9 = arith.constant 0 : index
    %9 = vector.load %arg2[%c1_7, %c0_8, %c0_9] : memref<5x28x128xbf16, #tpu.memory_space<vmem>>, vector<1x28x128xbf16>
    %10 = vector.shape_cast %9 : vector<1x28x128xbf16> to vector<28x128xbf16>
    %cst_10 = arith.constant dense<0.000000e+00> : vector<48x128xf32>
    %11 = tpu.matmul %8, %10, %cst_10 {dimension_numbers = #tpu.dot_dimension_numbers<[1], [0], [0], [1], [0, 0, 1, 1], [], []>} : vector<48x28xbf16>, vector<28x128xbf16>, vector<48x128xf32> -> vector<48x128xf32>
    %12 = arith.addf %5, %11 : vector<48x128xf32>
    %c0_11 = arith.constant 0 : index
    %c2 = arith.constant 2 : index
    %c0_12 = arith.constant 0 : index
    %13 = vector.load %arg1[%c0_11, %c2, %c0_12] : memref<2x28x28xf32, #tpu.memory_space<vmem>>, vector<2x24x28xf32>
    %14 = vector.shape_cast %13 : vector<2x24x28xf32> to vector<48x28xf32>
    %15 = arith.truncf %14 : vector<48x28xf32> to vector<48x28xbf16>
    %c2_13 = arith.constant 2 : index
    %c0_14 = arith.constant 0 : index
    %c0_15 = arith.constant 0 : index
    %16 = vector.load %arg2[%c2_13, %c0_14, %c0_15] : memref<5x28x128xbf16, #tpu.memory_space<vmem>>, vector<1x28x128xbf16>
    %17 = vector.shape_cast %16 : vector<1x28x128xbf16> to vector<28x128xbf16>
    %cst_16 = arith.constant dense<0.000000e+00> : vector<48x128xf32>
    %18 = tpu.matmul %15, %17, %cst_16 {dimension_numbers = #tpu.dot_dimension_numbers<[1], [0], [0], [1], [0, 0, 1, 1], [], []>} : vector<48x28xbf16>, vector<28x128xbf16>, vector<48x128xf32> -> vector<48x128xf32>
    %19 = arith.addf %12, %18 : vector<48x128xf32>
    %c0_17 = arith.constant 0 : index
    %c3 = arith.constant 3 : index
    %c0_18 = arith.constant 0 : index
    %20 = vector.load %arg1[%c0_17, %c3, %c0_18] : memref<2x28x28xf32, #tpu.memory_space<vmem>>, vector<2x24x28xf32>
    %21 = vector.shape_cast %20 : vector<2x24x28xf32> to vector<48x28xf32>
    %22 = arith.truncf %21 : vector<48x28xf32> to vector<48x28xbf16>
    %c3_19 = arith.constant 3 : index
    %c0_20 = arith.constant 0 : index
    %c0_21 = arith.constant 0 : index
    %23 = vector.load %arg2[%c3_19, %c0_20, %c0_21] : memref<5x28x128xbf16, #tpu.memory_space<vmem>>, vector<1x28x128xbf16>
    %24 = vector.shape_cast %23 : vector<1x28x128xbf16> to vector<28x128xbf16>
    %cst_22 = arith.constant dense<0.000000e+00> : vector<48x128xf32>
    %25 = tpu.matmul %22, %24, %cst_22 {dimension_numbers = #tpu.dot_dimension_numbers<[1], [0], [0], [1], [0, 0, 1, 1], [], []>} : vector<48x28xbf16>, vector<28x128xbf16>, vector<48x128xf32> -> vector<48x128xf32>
    %26 = arith.addf %19, %25 : vector<48x128xf32>
    %c0_23 = arith.constant 0 : index
    %c4 = arith.constant 4 : index
    %c0_24 = arith.constant 0 : index
    %27 = vector.load %arg1[%c0_23, %c4, %c0_24] : memref<2x28x28xf32, #tpu.memory_space<vmem>>, vector<2x24x28xf32>
    %28 = vector.shape_cast %27 : vector<2x24x28xf32> to vector<48x28xf32>
    %29 = arith.truncf %28 : vector<48x28xf32> to vector<48x28xbf16>
    %c4_25 = arith.constant 4 : index
    %c0_26 = arith.constant 0 : index
    %c0_27 = arith.constant 0 : index
    %30 = vector.load %arg2[%c4_25, %c0_26, %c0_27] : memref<5x28x128xbf16, #tpu.memory_space<vmem>>, vector<1x28x128xbf16>
    %31 = vector.shape_cast %30 : vector<1x28x128xbf16> to vector<28x128xbf16>
    %cst_28 = arith.constant dense<0.000000e+00> : vector<48x128xf32>
    %32 = tpu.matmul %29, %31, %cst_28 {dimension_numbers = #tpu.dot_dimension_numbers<[1], [0], [0], [1], [0, 0, 1, 1], [], []>} : vector<48x28xbf16>, vector<28x128xbf16>, vector<48x128xf32> -> vector<48x128xf32>
    %33 = arith.addf %26, %32 : vector<48x128xf32>
    %c0_29 = arith.constant 0 : index
    %c0_30 = arith.constant 0 : index
    %34 = vector.load %arg3[%c0_29, %c0_30] : memref<1x128xf32, #tpu.memory_space<vmem>>, vector<1x128xf32>
    %35 = vector.broadcast %34 : vector<1x128xf32> to vector<48x128xf32>
    %36 = arith.addf %33, %35 : vector<48x128xf32>
    %cst_31 = arith.constant 0.000000e+00 : f32
    %37 = vector.broadcast %cst_31 : f32 to vector<48x128xf32>
    %38 = arith.maximumf %36, %37 : vector<48x128xf32>
    %39 = vector.extract_strided_slice %38 {offsets = [0, 1], sizes = [48, 127], strides = [1, 1]} : vector<48x128xf32> to vector<48x127xf32>
    %40 = vector.extract_strided_slice %38 {offsets = [0, 0], sizes = [48, 1], strides = [1, 1]} : vector<48x128xf32> to vector<48x1xf32>
    %41 = tpu.concatenate %39, %40 in 1 : vector<48x127xf32>, vector<48x1xf32> -> vector<48x128xf32>
    %42 = arith.maximumf %38, %41 : vector<48x128xf32>
    %43 = vector.shape_cast %42 : vector<48x128xf32> to vector<2x24x128xf32>
    %c0_32 = arith.constant 0 : index
    %c0_33 = arith.constant 0 : index
    %c0_34 = arith.constant 0 : index
    %44 = vector.load %arg11[%c0_32, %c0_33, %c0_34] : memref<2x24x128xf32, #tpu.memory_space<vmem>>, vector<2x24x128xf32>
    tpu.vector_store %arg11[%c0_32, %c0_33, %c0_34], %43 {strides = array<i32>} : memref<2x24x128xf32, #tpu.memory_space<vmem>>, vector<2x24x128xf32>,
    %c0_35 = arith.constant 0 : index
    %c0_36 = arith.constant 0 : index
    %c0_37 = arith.constant 0 : index
    %45 = tpu.strided_load %arg11[%c0_35, %c0_36, %c0_37] {strides = array<i32: 1, 2, 1>} : memref<2x24x128xf32, #tpu.memory_space<vmem>>, vector<2x12x128xf32>
    %c0_38 = arith.constant 0 : index
    %c1_39 = arith.constant 1 : index
    %c0_40 = arith.constant 0 : index
    %46 = tpu.strided_load %arg11[%c0_38, %c1_39, %c0_40] {strides = array<i32: 1, 2, 1>} : memref<2x24x128xf32, #tpu.memory_space<vmem>>, vector<2x12x128xf32>
    %47 = arith.maximumf %45, %46 : vector<2x12x128xf32>
    %c0_41 = arith.constant 0 : index
    %c0_42 = arith.constant 0 : index
    %c0_43 = arith.constant 0 : index
    %48 = vector.load %arg12[%c0_41, %c0_42, %c0_43] : memref<2x12x128xf32, #tpu.memory_space<vmem>>, vector<2x12x128xf32>
    tpu.vector_store %arg12[%c0_41, %c0_42, %c0_43], %47 {strides = array<i32>} : memref<2x12x128xf32, #tpu.memory_space<vmem>>, vector<2x12x128xf32>,
    %c0_44 = arith.constant 0 : index
    %c0_45 = arith.constant 0 : index
    %c0_46 = arith.constant 0 : index
    %49 = vector.load %arg12[%c0_44, %c0_45, %c0_46] : memref<2x12x128xf32, #tpu.memory_space<vmem>>, vector<2x8x128xf32>
    %50 = vector.shape_cast %49 : vector<2x8x128xf32> to vector<16x128xf32>
    %51 = arith.truncf %50 : vector<16x128xf32> to vector<16x128xbf16>
    %c0_47 = arith.constant 0 : index
    %c0_48 = arith.constant 0 : index
    %c0_49 = arith.constant 0 : index
    %52 = vector.load %arg4[%c0_47, %c0_48, %c0_49] : memref<5x128x128xbf16, #tpu.memory_space<vmem>>, vector<1x128x128xbf16>
    %53 = vector.shape_cast %52 : vector<1x128x128xbf16> to vector<128x128xbf16>
    %cst_50 = arith.constant dense<0.000000e+00> : vector<16x128xf32>
    %54 = tpu.matmul %51, %53, %cst_50 {dimension_numbers = #tpu.dot_dimension_numbers<[1], [0], [0], [1], [0, 0, 1, 1], [], []>} : vector<16x128xbf16>, vector<128x128xbf16>, vector<16x128xf32> -> vector<16x128xf32>
    %c0_51 = arith.constant 0 : index
    %c1_52 = arith.constant 1 : index
    %c0_53 = arith.constant 0 : index
    %55 = vector.load %arg12[%c0_51, %c1_52, %c0_53] : memref<2x12x128xf32, #tpu.memory_space<vmem>>, vector<2x8x128xf32>
    %56 = vector.shape_cast %55 : vector<2x8x128xf32> to vector<16x128xf32>
    %57 = arith.truncf %56 : vector<16x128xf32> to vector<16x128xbf16>
    %c1_54 = arith.constant 1 : index
    %c0_55 = arith.constant 0 : index
    %c0_56 = arith.constant 0 : index
    %58 = vector.load %arg4[%c1_54, %c0_55, %c0_56] : memref<5x128x128xbf16, #tpu.memory_space<vmem>>, vector<1x128x128xbf16>
    %59 = vector.shape_cast %58 : vector<1x128x128xbf16> to vector<128x128xbf16>
    %cst_57 = arith.constant dense<0.000000e+00> : vector<16x128xf32>
    %60 = tpu.matmul %57, %59, %cst_57 {dimension_numbers = #tpu.dot_dimension_numbers<[1], [0], [0], [1], [0, 0, 1, 1], [], []>} : vector<16x128xbf16>, vector<128x128xbf16>, vector<16x128xf32> -> vector<16x128xf32>
    %61 = arith.addf %54, %60 : vector<16x128xf32>
    %c0_58 = arith.constant 0 : index
    %c2_59 = arith.constant 2 : index
    %c0_60 = arith.constant 0 : index
    %62 = vector.load %arg12[%c0_58, %c2_59, %c0_60] : memref<2x12x128xf32, #tpu.memory_space<vmem>>, vector<2x8x128xf32>
    %63 = vector.shape_cast %62 : vector<2x8x128xf32> to vector<16x128xf32>
    %64 = arith.truncf %63 : vector<16x128xf32> to vector<16x128xbf16>
    %c2_61 = arith.constant 2 : index
    %c0_62 = arith.constant 0 : index
    %c0_63 = arith.constant 0 : index
    %65 = vector.load %arg4[%c2_61, %c0_62, %c0_63] : memref<5x128x128xbf16, #tpu.memory_space<vmem>>, vector<1x128x128xbf16>
    %66 = vector.shape_cast %65 : vector<1x128x128xbf16> to vector<128x128xbf16>
    %cst_64 = arith.constant dense<0.000000e+00> : vector<16x128xf32>
    %67 = tpu.matmul %64, %66, %cst_64 {dimension_numbers = #tpu.dot_dimension_numbers<[1], [0], [0], [1], [0, 0, 1, 1], [], []>} : vector<16x128xbf16>, vector<128x128xbf16>, vector<16x128xf32> -> vector<16x128xf32>
    %68 = arith.addf %61, %67 : vector<16x128xf32>
    %c0_65 = arith.constant 0 : index
    %c3_66 = arith.constant 3 : index
    %c0_67 = arith.constant 0 : index
    %69 = vector.load %arg12[%c0_65, %c3_66, %c0_67] : memref<2x12x128xf32, #tpu.memory_space<vmem>>, vector<2x8x128xf32>
    %70 = vector.shape_cast %69 : vector<2x8x128xf32> to vector<16x128xf32>
    %71 = arith.truncf %70 : vector<16x128xf32> to vector<16x128xbf16>
    %c3_68 = arith.constant 3 : index
    %c0_69 = arith.constant 0 : index
    %c0_70 = arith.constant 0 : index
    %72 = vector.load %arg4[%c3_68, %c0_69, %c0_70] : memref<5x128x128xbf16, #tpu.memory_space<vmem>>, vector<1x128x128xbf16>
    %73 = vector.shape_cast %72 : vector<1x128x128xbf16> to vector<128x128xbf16>
    %cst_71 = arith.constant dense<0.000000e+00> : vector<16x128xf32>
    %74 = tpu.matmul %71, %73, %cst_71 {dimension_numbers = #tpu.dot_dimension_numbers<[1], [0], [0], [1], [0, 0, 1, 1], [], []>} : vector<16x128xbf16>, vector<128x128xbf16>, vector<16x128xf32> -> vector<16x128xf32>
    %75 = arith.addf %68, %74 : vector<16x128xf32>
    %c0_72 = arith.constant 0 : index
    %c4_73 = arith.constant 4 : index
    %c0_74 = arith.constant 0 : index
    %76 = vector.load %arg12[%c0_72, %c4_73, %c0_74] : memref<2x12x128xf32, #tpu.memory_space<vmem>>, vector<2x8x128xf32>
    %77 = vector.shape_cast %76 : vector<2x8x128xf32> to vector<16x128xf32>
    %78 = arith.truncf %77 : vector<16x128xf32> to vector<16x128xbf16>
    %c4_75 = arith.constant 4 : index
    %c0_76 = arith.constant 0 : index
    %c0_77 = arith.constant 0 : index
    %79 = vector.load %arg4[%c4_75, %c0_76, %c0_77] : memref<5x128x128xbf16, #tpu.memory_space<vmem>>, vector<1x128x128xbf16>
    %80 = vector.shape_cast %79 : vector<1x128x128xbf16> to vector<128x128xbf16>
    %cst_78 = arith.constant dense<0.000000e+00> : vector<16x128xf32>
    %81 = tpu.matmul %78, %80, %cst_78 {dimension_numbers = #tpu.dot_dimension_numbers<[1], [0], [0], [1], [0, 0, 1, 1], [], []>} : vector<16x128xbf16>, vector<128x128xbf16>, vector<16x128xf32> -> vector<16x128xf32>
    %82 = arith.addf %75, %81 : vector<16x128xf32>
    %c0_79 = arith.constant 0 : index
    %c0_80 = arith.constant 0 : index
    %83 = vector.load %arg5[%c0_79, %c0_80] : memref<1x128xf32, #tpu.memory_space<vmem>>, vector<1x128xf32>
    %84 = vector.broadcast %83 : vector<1x128xf32> to vector<16x128xf32>
    %85 = arith.addf %82, %84 : vector<16x128xf32>
    %cst_81 = arith.constant 0.000000e+00 : f32
    %86 = vector.broadcast %cst_81 : f32 to vector<16x128xf32>
    %87 = arith.maximumf %85, %86 : vector<16x128xf32>
    %88 = vector.extract_strided_slice %87 {offsets = [0, 1], sizes = [16, 127], strides = [1, 1]} : vector<16x128xf32> to vector<16x127xf32>
    %89 = vector.extract_strided_slice %87 {offsets = [0, 0], sizes = [16, 1], strides = [1, 1]} : vector<16x128xf32> to vector<16x1xf32>
    %90 = tpu.concatenate %88, %89 in 1 : vector<16x127xf32>, vector<16x1xf32> -> vector<16x128xf32>
    %91 = arith.maximumf %87, %90 : vector<16x128xf32>
    %92 = vector.shape_cast %91 : vector<16x128xf32> to vector<2x8x128xf32>
    %c0_82 = arith.constant 0 : index
    %c0_83 = arith.constant 0 : index
    %c0_84 = arith.constant 0 : index
    %93 = vector.load %arg13[%c0_82, %c0_83, %c0_84] : memref<2x8x128xf32, #tpu.memory_space<vmem>>, vector<2x8x128xf32>
    tpu.vector_store %arg13[%c0_82, %c0_83, %c0_84], %92 {strides = array<i32>} : memref<2x8x128xf32, #tpu.memory_space<vmem>>, vector<2x8x128xf32>,
    %c0_85 = arith.constant 0 : index
    %c0_86 = arith.constant 0 : index
    %c0_87 = arith.constant 0 : index
    %94 = tpu.strided_load %arg13[%c0_85, %c0_86, %c0_87] {strides = array<i32: 1, 2, 1>} : memref<2x8x128xf32, #tpu.memory_space<vmem>>, vector<2x4x128xf32>
    %c0_88 = arith.constant 0 : index
    %c1_89 = arith.constant 1 : index
    %c0_90 = arith.constant 0 : index
    %95 = tpu.strided_load %arg13[%c0_88, %c1_89, %c0_90] {strides = array<i32: 1, 2, 1>} : memref<2x8x128xf32, #tpu.memory_space<vmem>>, vector<2x4x128xf32>
    %96 = arith.maximumf %94, %95 : vector<2x4x128xf32>
    %97 = vector.extract_strided_slice %96 {offsets = [0, 0, 0], sizes = [2, 1, 128], strides = [1, 1, 1]} : vector<2x4x128xf32> to vector<2x1x128xf32>
    %98 = vector.shape_cast %97 : vector<2x1x128xf32> to vector<2x128xf32>
    %c0_91 = arith.constant 0 : index
    %c0_92 = arith.constant 0 : index
    %99 = vector.load %arg14[%c0_91, %c0_92] : memref<2x512xf32, #tpu.memory_space<vmem>>, vector<2x128xf32>
    tpu.vector_store %arg14[%c0_91, %c0_92], %98 {strides = array<i32>} : memref<2x512xf32, #tpu.memory_space<vmem>>, vector<2x128xf32>,
    %100 = vector.extract_strided_slice %96 {offsets = [0, 1, 0], sizes = [2, 1, 128], strides = [1, 1, 1]} : vector<2x4x128xf32> to vector<2x1x128xf32>
    %101 = vector.shape_cast %100 : vector<2x1x128xf32> to vector<2x128xf32>
    %c0_93 = arith.constant 0 : index
    %c128 = arith.constant 128 : index
    %102 = vector.load %arg14[%c0_93, %c128] : memref<2x512xf32, #tpu.memory_space<vmem>>, vector<2x128xf32>
    tpu.vector_store %arg14[%c0_93, %c128], %101 {strides = array<i32>} : memref<2x512xf32, #tpu.memory_space<vmem>>, vector<2x128xf32>,
    %103 = vector.extract_strided_slice %96 {offsets = [0, 2, 0], sizes = [2, 1, 128], strides = [1, 1, 1]} : vector<2x4x128xf32> to vector<2x1x128xf32>
    %104 = vector.shape_cast %103 : vector<2x1x128xf32> to vector<2x128xf32>
    %c0_94 = arith.constant 0 : index
    %c256 = arith.constant 256 : index
    %105 = vector.load %arg14[%c0_94, %c256] : memref<2x512xf32, #tpu.memory_space<vmem>>, vector<2x128xf32>
    tpu.vector_store %arg14[%c0_94, %c256], %104 {strides = array<i32>} : memref<2x512xf32, #tpu.memory_space<vmem>>, vector<2x128xf32>,
    %106 = vector.extract_strided_slice %96 {offsets = [0, 3, 0], sizes = [2, 1, 128], strides = [1, 1, 1]} : vector<2x4x128xf32> to vector<2x1x128xf32>
    %107 = vector.shape_cast %106 : vector<2x1x128xf32> to vector<2x128xf32>
    %c0_95 = arith.constant 0 : index
    %c384 = arith.constant 384 : index
    %108 = vector.load %arg14[%c0_95, %c384] : memref<2x512xf32, #tpu.memory_space<vmem>>, vector<2x128xf32>
    tpu.vector_store %arg14[%c0_95, %c384], %107 {strides = array<i32>} : memref<2x512xf32, #tpu.memory_space<vmem>>, vector<2x128xf32>,
    %c0_96 = arith.constant 0 : index
    %c0_97 = arith.constant 0 : index
    %109 = vector.load %arg14[%c0_96, %c0_97] : memref<2x512xf32, #tpu.memory_space<vmem>>, vector<2x512xf32>
    %110 = arith.truncf %109 : vector<2x512xf32> to vector<2x512xbf16>
    %c0_98 = arith.constant 0 : index
    %c0_99 = arith.constant 0 : index
    %111 = vector.load %arg6[%c0_98, %c0_99] : memref<512x512xbf16, #tpu.memory_space<vmem>>, vector<512x512xbf16>
    %cst_100 = arith.constant dense<0.000000e+00> : vector<2x512xf32>
    %112 = tpu.matmul %110, %111, %cst_100 {dimension_numbers = #tpu.dot_dimension_numbers<[1], [0], [0], [1], [0, 0, 1, 1], [], []>} : vector<2x512xbf16>, vector<512x512xbf16>, vector<2x512xf32> -> vector<2x512xf32>
    %c0_101 = arith.constant 0 : index
    %c0_102 = arith.constant 0 : index
    %113 = vector.load %arg7[%c0_101, %c0_102] : memref<1x512xf32, #tpu.memory_space<vmem>>, vector<1x512xf32>
    %114 = vector.broadcast %113 : vector<1x512xf32> to vector<2x512xf32>
    %115 = arith.addf %112, %114 : vector<2x512xf32>
    %cst_103 = arith.constant 0.000000e+00 : f32
    %116 = vector.broadcast %cst_103 : f32 to vector<2x512xf32>
    %117 = arith.maximumf %115, %116 : vector<2x512xf32>
    %c0_104 = arith.constant 0 : index
    %c0_105 = arith.constant 0 : index
    %118 = vector.load %arg8[%c0_104, %c0_105] : memref<512x10xf32, #tpu.memory_space<vmem>>, vector<512x10xf32>
    %cst_106 = arith.constant dense<0.000000e+00> : vector<2x10xf32>
    %119 = tpu.matmul %117, %118, %cst_106 {dimension_numbers = #tpu.dot_dimension_numbers<[1], [0], [0], [1], [0, 0, 1, 1], [], []>} : vector<2x512xf32>, vector<512x10xf32>, vector<2x10xf32> -> vector<2x10xf32>
    %c0_107 = arith.constant 0 : index
    %c0_108 = arith.constant 0 : index
    %120 = vector.load %arg9[%c0_107, %c0_108] : memref<1x10xf32, #tpu.memory_space<vmem>>, vector<1x10xf32>
    %121 = vector.broadcast %120 : vector<1x10xf32> to vector<2x10xf32>
    %122 = arith.addf %119, %121 : vector<2x10xf32>
    %cst_109 = arith.constant dense<0xFF800000> : vector<2xf32>
    %123 = vector.multi_reduction <maximumf>, %122, %cst_109 [1] : vector<2x10xf32> to vector<2xf32>
    %124 = vector.shape_cast %123 : vector<2xf32> to vector<2x1xf32>
    %125 = vector.broadcast %124 : vector<2x1xf32> to vector<2x10xf32>
    %126 = arith.subf %122, %125 : vector<2x10xf32>
    %127 = math.exp %126 : vector<2x10xf32>
    %cst_110 = arith.constant dense<0.000000e+00> : vector<2xf32>
    %128 = vector.multi_reduction <add>, %127, %cst_110 [1] : vector<2x10xf32> to vector<2xf32>
    %129 = vector.shape_cast %128 : vector<2xf32> to vector<2x1xf32>
    %130 = math.log %129 : vector<2x1xf32>
    %131 = arith.addf %130, %124 : vector<2x1xf32>
    %132 = vector.broadcast %131 : vector<2x1xf32> to vector<2x10xf32>
    %133 = arith.subf %122, %132 : vector<2x10xf32>
    %c0_111 = arith.constant 0 : index
    %c0_112 = arith.constant 0 : index
    %134 = vector.load %arg10[%c0_111, %c0_112] : memref<2x10xf32, #tpu.memory_space<vmem>>, vector<2x10xf32>
    tpu.vector_store %arg10[%c0_111, %c0_112], %133 {strides = array<i32>} : memref<2x10xf32, #tpu.memory_space<vmem>>, vector<2x10xf32>,
    return
  }
  func.func @transform_0(%arg0: i32) -> (i32, i32, i32) {
    %c0_i32 = arith.constant 0 : i32
    %c0_i32_0 = arith.constant 0 : i32
    %c0_i32_1 = arith.constant 0 : i32
    return %arg0, %c0_i32, %c0_i32_0 : i32, i32, i32
  }
  func.func @transform_1(%arg0: i32) -> (i32, i32, i32) {
    %c0_i32 = arith.constant 0 : i32
    %c0_i32_0 = arith.constant 0 : i32
    %c0_i32_1 = arith.constant 0 : i32
    %c0_i32_2 = arith.constant 0 : i32
    return %c0_i32, %c0_i32_0, %c0_i32_1 : i32, i32, i32
  }
  func.func @transform_2(%arg0: i32) -> (i32, i32) {
    %c0_i32 = arith.constant 0 : i32
    %c0_i32_0 = arith.constant 0 : i32
    %c0_i32_1 = arith.constant 0 : i32
    return %c0_i32, %c0_i32_0 : i32, i32
  }
  func.func @transform_3(%arg0: i32) -> (i32, i32, i32) {
    %c0_i32 = arith.constant 0 : i32
    %c0_i32_0 = arith.constant 0 : i32
    %c0_i32_1 = arith.constant 0 : i32
    %c0_i32_2 = arith.constant 0 : i32
    return %c0_i32, %c0_i32_0, %c0_i32_1 : i32, i32, i32
  }
  func.func @transform_4(%arg0: i32) -> (i32, i32) {
    %c0_i32 = arith.constant 0 : i32
    %c0_i32_0 = arith.constant 0 : i32
    %c0_i32_1 = arith.constant 0 : i32
    return %c0_i32, %c0_i32_0 : i32, i32
  }
  func.func @transform_5(%arg0: i32) -> (i32, i32) {
    %c0_i32 = arith.constant 0 : i32
    %c0_i32_0 = arith.constant 0 : i32
    %c0_i32_1 = arith.constant 0 : i32
    return %c0_i32, %c0_i32_0 : i32, i32
  }
  func.func @transform_6(%arg0: i32) -> (i32, i32) {
    %c0_i32 = arith.constant 0 : i32
    %c0_i32_0 = arith.constant 0 : i32
    %c0_i32_1 = arith.constant 0 : i32
    return %c0_i32, %c0_i32_0 : i32, i32
  }
  func.func @transform_7(%arg0: i32) -> (i32, i32) {
    %c0_i32 = arith.constant 0 : i32
    %c0_i32_0 = arith.constant 0 : i32
    %c0_i32_1 = arith.constant 0 : i32
    return %c0_i32, %c0_i32_0 : i32, i32
  }
  func.func @transform_8(%arg0: i32) -> (i32, i32) {
    %c0_i32 = arith.constant 0 : i32
    %c0_i32_0 = arith.constant 0 : i32
    %c0_i32_1 = arith.constant 0 : i32
    return %c0_i32, %c0_i32_0 : i32, i32
  }
  func.func @transform_9(%arg0: i32) -> (i32, i32) {
    %c0_i32 = arith.constant 0 : i32
    %c0_i32_0 = arith.constant 0 : i32
    return %arg0, %c0_i32 : i32, i32
  }
}

</mosaic_0001>

<llo_original>
// kernel: net_synthetic_forward.1
$region0: #{net_synthetic_forward.1}
  #allocation0 [shape = 'u32[]', space=smem, size = 0x4, offset = 0x4, fixed_abs, tag = 'smem constant byte address 0x4 - core index']
  #allocation1 [shape = 'u32[72,128]{1,0:T(1,128)}', space=vmem, size = 0x9000, scoped, tag = 'internal scratch']
  #allocation2 [shape = 'f32[2,24,128]{2,1,0:T(8,128)}', space=vmem, size = 0x6000, scoped, tag = 'scratch operand']
  #allocation3 [shape = 'f32[2,12,128]{2,1,0:T(8,128)}', space=vmem, size = 0x4000, scoped, tag = 'scratch operand']
  #allocation4 [shape = 'f32[2,8,128]{2,1,0:T(8,128)}', space=vmem, size = 0x2000, scoped, tag = 'scratch operand']
  #allocation5 [shape = 'f32[2,512]{1,0:T(2,128)}', space=vmem, size = 0x1000, scoped, tag = 'scratch operand']
  %s0 = inlined_call_operand.vmem [shape: f32[2,28,28], index: 0, kind: input, shape index: {}]
  %s1 = inlined_call_operand.vmem [shape: bf16[5,28,128], index: 1, kind: input, shape index: {}]
  %s2 = inlined_call_operand.vmem [shape: f32[1,128], index: 2, kind: input, shape index: {}]
  %s3 = inlined_call_operand.vmem [shape: bf16[5,128,128], index: 3, kind: input, shape index: {}]
  %s4 = inlined_call_operand.vmem [shape: f32[1,128], index: 4, kind: input, shape index: {}]
  %s5 = inlined_call_operand.hbm [shape: bf16[512,512], index: 5, kind: input, shape index: {}]
  %s6 = inlined_call_operand.vmem [shape: f32[1,512], index: 6, kind: input, shape index: {}]
  %s7 = inlined_call_operand.vmem [shape: f32[512,10], index: 7, kind: input, shape index: {}]
  %s8 = inlined_call_operand.vmem [shape: f32[1,10], index: 8, kind: input, shape index: {}]
  %s9 = inlined_call_operand.hbm [shape: f32[2,10], index: 9, kind: output, shape index: {}]
  %s10 = sld [smem:[#allocation0]]
  $region50: #{net_synthetic_forward.1} parent=0
    _
  %s12 = ssub.s32 1, %s10
  %s13 = scalar_select 0, %s12, %s10
  $region1: #{net_synthetic_forward.1} parent=0
    #allocation6 [shape = 'u8[524288]{0}', space=vmem, size = 0x80000, scoped, tag = 'input window, operand 5, single buffered']
    #allocation7 [shape = 's32[1]{0}', space=sflag, size = 0x4, scoped, tag = 'scoped memory for net_synthetic_forward.1']
    #allocation8 [shape = 's32[1]{0}', space=sflag, size = 0x4, scoped, tag = 'scoped memory for net_synthetic_forward.1']
    #allocation9 [shape = 'u8[1024]{0}', space=vmem, size = 0x400, scoped, tag = 'output window, operand 0, single buffered']
    %14 = vsyncpa [#allocation7], 0
    %15 = vsyncpa [#allocation8], 0
    // Predicated region
    $region2: #{net_synthetic_forward.1} parent=1 // pred_check
      _
    $region3: #{net_synthetic_forward.1} parent=1 // pred_check_branch
      %17 = sbr.rel (0) target = $region5
    $region4: #{net_synthetic_forward.1} parent=1 // pred_region
      _
    $region5: #{net_synthetic_forward.1} parent=1 // pred_fallthru
      _
    // Predicated region
    $region6: #{net_synthetic_forward.1} parent=1 // pred_check
      _
    $region7: #{net_synthetic_forward.1} parent=1 // pred_check_branch
      %19 = sbr.rel (0) target = $region9
    $region8: #{net_synthetic_forward.1} parent=1 // pred_region
      _
    $region9: #{net_synthetic_forward.1} parent=1 // pred_fallthru
      _
    // Predicated region
    $region10: #{net_synthetic_forward.1} parent=1 // pred_check
      _
    $region11: #{net_synthetic_forward.1} parent=1 // pred_check_branch
      %21 = sbr.rel (0) target = $region13
    $region12: #{net_synthetic_forward.1} parent=1 // pred_region
      _
    $region13: #{net_synthetic_forward.1} parent=1 // pred_fallthru
      _
    // Predicated region
    $region14: #{net_synthetic_forward.1} parent=1 // pred_check
      _
    $region15: #{net_synthetic_forward.1} parent=1 // pred_check_branch
      %23 = sbr.rel (0) target = $region17
    $region16: #{net_synthetic_forward.1} parent=1 // pred_region
      _
    $region17: #{net_synthetic_forward.1} parent=1 // pred_fallthru
      _
    // Predicated region
    $region18: #{net_synthetic_forward.1} parent=1 // pred_check
      _
    $region19: #{net_synthetic_forward.1} parent=1 // pred_check_branch
      %25 = sbr.rel (0) target = $region21
    $region20: #{net_synthetic_forward.1} parent=1 // pred_region
      _
    $region21: #{net_synthetic_forward.1} parent=1 // pred_fallthru
      _
    // Predicated region
    $region22: #{net_synthetic_forward.1} parent=1 // pred_check
      _
    $region23: #{net_synthetic_forward.1} parent=1 // pred_check_branch
      %27 = sbr.rel (0) target = $region25
    $region24: #{net_synthetic_forward.1} parent=1 // pred_region
      %29 = vsyncadd [#allocation7], 0
      %s30 = sshll.u32 %s5, 4
      %s31 = int_to_ptr.hbm [resolvable:$true] %s30
      %s32 = sshll.u32 [#allocation6], 4
      %s33 = int_to_ptr.vmem [resolvable:$true] %s32
      %38 = dma.hbm_to_vmem [thread:$0]  %s31, 16384, %s33, [#allocation7], 256, 256, 16
    $region25: #{net_synthetic_forward.1} parent=1 // pred_fallthru
      _
    // Predicated region
    $region26: #{net_synthetic_forward.1} parent=1 // pred_check
      _
    $region27: #{net_synthetic_forward.1} parent=1 // pred_check_branch
      %40 = sbr.rel (0) target = $region29
    $region28: #{net_synthetic_forward.1} parent=1 // pred_region
      _
    $region29: #{net_synthetic_forward.1} parent=1 // pred_fallthru
      _
    // Predicated region
    $region30: #{net_synthetic_forward.1} parent=1 // pred_check
      _
    $region31: #{net_synthetic_forward.1} parent=1 // pred_check_branch
      %42 = sbr.rel (0) target = $region33
    $region32: #{net_synthetic_forward.1} parent=1 // pred_region
      _
    $region33: #{net_synthetic_forward.1} parent=1 // pred_fallthru
      _
    // Predicated region
    $region34: #{net_synthetic_forward.1} parent=1 // pred_check
      _
    $region35: #{net_synthetic_forward.1} parent=1 // pred_check_branch
      %44 = sbr.rel (0) target = $region37
    $region36: #{net_synthetic_forward.1} parent=1 // pred_region
      _
    $region37: #{net_synthetic_forward.1} parent=1 // pred_fallthru
      _
    // Predicated region
    $region38: #{net_synthetic_forward.1} parent=1 // pred_check
      _
    $region39: #{net_synthetic_forward.1} parent=1 // pred_check_branch
      %46 = sbr.rel (0) target = $region41
    $region40: #{net_synthetic_forward.1} parent=1 // pred_region
      %48 = dma.done [#allocation7], 16384
    $region41: #{net_synthetic_forward.1} parent=1 // pred_fallthru
      _
    %v50 = vld [vmem:[%s0] sm:$0xff]
    %v51 = vld [vmem:[%s0 + $0x8] sm:$0xff]
    %v52 = vld [vmem:[%s0 + $0x10] sm:$0xff]
    %v53 = vld [vmem:[%s0 + $0x20] sm:$0xff]
    %v54 = vld [vmem:[%s0 + $0x28] sm:$0xff]
    %v55 = vld [vmem:[%s0 + $0x30] sm:$0xff]
    %v56 = vpack.c.bf16 %v51, %v50
    %v57 = vpack.c.bf16 %v53, %v52
    %v58 = vpack.c.bf16 %v55, %v54
    %v59 = vld [vmem:[%s1] sm:$0xf]
    %v60 = vld [vmem:[%s1 + $0x4] sm:$0xf]
    %v61 = vld [vmem:[%s1 + $0x8] sm:$0xf]
    %v62 = vld [vmem:[%s1 + $0xc] sm:$0x3]
    %v63 = vld [vmem:[%s0 + $0x1] sm:$0xff]
    %v64 = vld [vmem:[%s0 + $0x9] sm:$0xff]
    %v65 = vld [vmem:[%s0 + $0x11] sm:$0xff]
    %v66 = vld [vmem:[%s0 + $0x21] sm:$0xff]
    %v67 = vld [vmem:[%s0 + $0x29] sm:$0xff]
    %v68 = vld [vmem:[%s0 + $0x31] sm:$0xff]
    %v69 = vpack.c.bf16 %v64, %v63
    %v70 = vpack.c.bf16 %v66, %v65
    %v71 = vpack.c.bf16 %v68, %v67
    %s72 = scalar_lea.vmem %s1, 16
    %v73 = vld [vmem:[%s72] sm:$0xf]
    %v74 = vld [vmem:[%s72 + $0x4] sm:$0xf]
    %v75 = vld [vmem:[%s72 + $0x8] sm:$0xf]
    %v76 = vld [vmem:[%s72 + $0xc] sm:$0x3]
    %v81 = vunpack.c.l.b16 %v73
    %v82 = vunpack.c.l.b16 %v74
    %v83 = vunpack.c.l.b16 %v75
    %v84 = vunpack.c.l.b16 %v76
    %v85 = vpack.c.b16 %v82, %v81
    %v86 = vpack.c.b16 %v84, %v83
    %vm88 = vcmask 228352
    %v90 = vsel %vm88, %v69, 0
    %v93 = vsel %vm88, %v70, 0
    %v96 = vsel %vm88, %v71, 0
    %vm98 = vcmask 1045504
    %v100 = vsel %vm98, %v86, 0
    %102 = vmatpush.bf16.msra.mxu0 0
    %103 = vmatpush.bf16.msra.mxu0 0
    %104 = vmatpush.bf16.msra.mxu0 0
    %105 = vmatpush.bf16.msra.mxu0 0
    %106 = vmatpush.bf16.msra.mxu0 0
    %107 = vmatpush.bf16.msra.mxu0 0
    %108 = vmatpush.bf16.msra.mxu0 %v100
    %109 = vmatpush.bf16.msra.mxu0 %v85
    %110 = vmatmul.bf16.gmra.mxu0 %v90
    %v111 = vpop.f32.mrf.mxu0
    %v112 = vadd.f32 0.0, %v111
    %v113 = vpop.f32.mrf.mxu0
    %v114 = vadd.f32 0.0, %v113
    %115 = vmatmul.bf16.gmra.mxu0 %v93
    %v116 = vpop.f32.mrf.mxu0
    %v117 = vadd.f32 0.0, %v116
    %v118 = vpop.f32.mrf.mxu0
    %v119 = vadd.f32 0.0, %v118
    %120 = vmatmul.bf16.gmra.mxu0 %v96
    %v121 = vpop.f32.mrf.mxu0
    %v122 = vadd.f32 0.0, %v121
    %v123 = vpop.f32.mrf.mxu0
    %v124 = vadd.f32 0.0, %v123
    %125 = vdwg.mxu0
    %v130 = vunpack.c.l.b16 %v59
    %v131 = vunpack.c.l.b16 %v60
    %v132 = vunpack.c.l.b16 %v61
    %v133 = vunpack.c.l.b16 %v62
    %v134 = vpack.c.b16 %v131, %v130
    %v135 = vpack.c.b16 %v133, %v132
    %v138 = vsel %vm88, %v56, 0
    %v141 = vsel %vm88, %v57, 0
    %v144 = vsel %vm88, %v58, 0
    %v147 = vsel %vm98, %v135, 0
    %149 = vmatpush.bf16.msra.mxu0 0
    %150 = vmatpush.bf16.msra.mxu0 0
    %151 = vmatpush.bf16.msra.mxu0 0
    %152 = vmatpush.bf16.msra.mxu0 0
    %153 = vmatpush.bf16.msra.mxu0 0
    %154 = vmatpush.bf16.msra.mxu0 0
    %155 = vmatpush.bf16.msra.mxu0 %v147
    %156 = vmatpush.bf16.msra.mxu0 %v134
    %157 = vmatmul.bf16.gmra.mxu0 %v138
    %v158 = vpop.f32.mrf.mxu0
    %v159 = vadd.f32 %v112, %v158
    %v160 = vpop.f32.mrf.mxu0
    %v161 = vadd.f32 %v114, %v160
    %162 = vmatmul.bf16.gmra.mxu0 %v141
    %v163 = vpop.f32.mrf.mxu0
    %v164 = vadd.f32 %v117, %v163
    %v165 = vpop.f32.mrf.mxu0
    %v166 = vadd.f32 %v119, %v165
    %167 = vmatmul.bf16.gmra.mxu0 %v144
    %v168 = vpop.f32.mrf.mxu0
    %v169 = vadd.f32 %v122, %v168
    %v170 = vpop.f32.mrf.mxu0
    %v171 = vadd.f32 %v124, %v170
    %172 = vdwg.mxu0
    %v173 = vld [vmem:[%s0 + $0x2] sm:$0xff]
    %v174 = vld [vmem:[%s0 + $0xa] sm:$0xff]
    %v175 = vld [vmem:[%s0 + $0x12] sm:$0xff]
    %v176 = vld [vmem:[%s0 + $0x22] sm:$0xff]
    %v177 = vld [vmem:[%s0 + $0x2a] sm:$0xff]
    %v178 = vld [vmem:[%s0 + $0x32] sm:$0xff]
    %v179 = vpack.c.bf16 %v174, %v173
    %v180 = vpack.c.bf16 %v176, %v175
    %v181 = vpack.c.bf16 %v178, %v177
    %s182 = scalar_lea.vmem %s1, 32
    %v183 = vld [vmem:[%s182] sm:$0xf]
    %v184 = vld [vmem:[%s182 + $0x4] sm:$0xf]
    %v185 = vld [vmem:[%s182 + $0x8] sm:$0xf]
    %v186 = vld [vmem:[%s182 + $0xc] sm:$0x3]
    %v191 = vunpack.c.l.b16 %v183
    %v192 = vunpack.c.l.b16 %v184
    %v193 = vunpack.c.l.b16 %v185
    %v194 = vunpack.c.l.b16 %v186
    %v195 = vpack.c.b16 %v192, %v191
    %v196 = vpack.c.b16 %v194, %v193
    %v199 = vsel %vm88, %v179, 0
    %v202 = vsel %vm88, %v180, 0
    %v205 = vsel %vm88, %v181, 0
    %v208 = vsel %vm98, %v196, 0
    %210 = vmatpush.bf16.msra.mxu0 0
    %211 = vmatpush.bf16.msra.mxu0 0
    %212 = vmatpush.bf16.msra.mxu0 0
    %213 = vmatpush.bf16.msra.mxu0 0
    %214 = vmatpush.bf16.msra.mxu0 0
    %215 = vmatpush.bf16.msra.mxu0 0
    %216 = vmatpush.bf16.msra.mxu0 %v208
    %217 = vmatpush.bf16.msra.mxu0 %v195
    %218 = vmatmul.bf16.gmra.mxu0 %v199
    %v219 = vpop.f32.mrf.mxu0
    %v220 = vadd.f32 0.0, %v219
    %v221 = vpop.f32.mrf.mxu0
    %v222 = vadd.f32 0.0, %v221
    %223 = vmatmul.bf16.gmra.mxu0 %v202
    %v224 = vpop.f32.mrf.mxu0
    %v225 = vadd.f32 0.0, %v224
    %v226 = vpop.f32.mrf.mxu0
    %v227 = vadd.f32 0.0, %v226
    %228 = vmatmul.bf16.gmra.mxu0 %v205
    %v229 = vpop.f32.mrf.mxu0
    %v230 = vadd.f32 0.0, %v229
    %v231 = vpop.f32.mrf.mxu0
    %v232 = vadd.f32 0.0, %v231
    %233 = vdwg.mxu0
    %v234 = vadd.f32 %v159, %v220
    %v235 = vadd.f32 %v161, %v222
    %v236 = vadd.f32 %v164, %v225
    %v237 = vadd.f32 %v166, %v227
    %v238 = vadd.f32 %v169, %v230
    %v239 = vadd.f32 %v171, %v232
    %v240 = vld [vmem:[%s0 + $0x3] sm:$0xff]
    %v241 = vld [vmem:[%s0 + $0xb] sm:$0xff]
    %v242 = vld [vmem:[%s0 + $0x13] sm:$0xff]
    %v243 = vld [vmem:[%s0 + $0x23] sm:$0xff]
    %v244 = vld [vmem:[%s0 + $0x2b] sm:$0xff]
    %v245 = vld [vmem:[%s0 + $0x33] sm:$0xff]
    %v246 = vpack.c.bf16 %v241, %v240
    %v247 = vpack.c.bf16 %v243, %v242
    %v248 = vpack.c.bf16 %v245, %v244
    %s249 = scalar_lea.vmem %s1, 48
    %v250 = vld [vmem:[%s249] sm:$0xf]
    %v251 = vld [vmem:[%s249 + $0x4] sm:$0xf]
    %v252 = vld [vmem:[%s249 + $0x8] sm:$0xf]
    %v253 = vld [vmem:[%s249 + $0xc] sm:$0x3]
    %v258 = vunpack.c.l.b16 %v250
    %v259 = vunpack.c.l.b16 %v251
    %v260 = vunpack.c.l.b16 %v252
    %v261 = vunpack.c.l.b16 %v253
    %v262 = vpack.c.b16 %v259, %v258
    %v263 = vpack.c.b16 %v261, %v260
    %v266 = vsel %vm88, %v246, 0
    %v269 = vsel %vm88, %v247, 0
    %v272 = vsel %vm88, %v248, 0
    %v275 = vsel %vm98, %v263, 0
    %277 = vmatpush.bf16.msra.mxu0 0
    %278 = vmatpush.bf16.msra.mxu0 0
    %279 = vmatpush.bf16.msra.mxu0 0
    %280 = vmatpush.bf16.msra.mxu0 0
    %281 = vmatpush.bf16.msra.mxu0 0
    %282 = vmatpush.bf16.msra.mxu0 0
    %283 = vmatpush.bf16.msra.mxu0 %v275
    %284 = vmatpush.bf16.msra.mxu0 %v262
    %285 = vmatmul.bf16.gmra.mxu0 %v266
    %v286 = vpop.f32.mrf.mxu0
    %v287 = vadd.f32 0.0, %v286
    %v288 = vpop.f32.mrf.mxu0
    %v289 = vadd.f32 0.0, %v288
    %290 = vmatmul.bf16.gmra.mxu0 %v269
    %v291 = vpop.f32.mrf.mxu0
    %v292 = vadd.f32 0.0, %v291
    %v293 = vpop.f32.mrf.mxu0
    %v294 = vadd.f32 0.0, %v293
    %295 = vmatmul.bf16.gmra.mxu0 %v272
    %v296 = vpop.f32.mrf.mxu0
    %v297 = vadd.f32 0.0, %v296
    %v298 = vpop.f32.mrf.mxu0
    %v299 = vadd.f32 0.0, %v298
    %300 = vdwg.mxu0
    %v301 = vadd.f32 %v234, %v287
    %v302 = vadd.f32 %v235, %v289
    %v303 = vadd.f32 %v236, %v292
    %v304 = vadd.f32 %v237, %v294
    %v305 = vadd.f32 %v238, %v297
    %v306 = vadd.f32 %v239, %v299
    %v307 = vld [vmem:[%s0 + $0x4] sm:$0xff]
    %v308 = vld [vmem:[%s0 + $0xc] sm:$0xff]
    %v309 = vld [vmem:[%s0 + $0x14] sm:$0xff]
    %v310 = vld [vmem:[%s0 + $0x24] sm:$0xff]
    %v311 = vld [vmem:[%s0 + $0x2c] sm:$0xff]
    %v312 = vld [vmem:[%s0 + $0x34] sm:$0xff]
    %v313 = vpack.c.bf16 %v308, %v307
    %v314 = vpack.c.bf16 %v310, %v309
    %v315 = vpack.c.bf16 %v312, %v311
    %s316 = scalar_lea.vmem %s1, 64
    %v317 = vld [vmem:[%s316] sm:$0xf]
    %v318 = vld [vmem:[%s316 + $0x4] sm:$0xf]
    %v319 = vld [vmem:[%s316 + $0x8] sm:$0xf]
    %v320 = vld [vmem:[%s316 + $0xc] sm:$0x3]
    %v325 = vunpack.c.l.b16 %v317
    %v326 = vunpack.c.l.b16 %v318
    %v327 = vunpack.c.l.b16 %v319
    %v328 = vunpack.c.l.b16 %v320
    %v329 = vpack.c.b16 %v326, %v325
    %v330 = vpack.c.b16 %v328, %v327
    %v333 = vsel %vm88, %v313, 0
    %v336 = vsel %vm88, %v314, 0
    %v339 = vsel %vm88, %v315, 0
    %v342 = vsel %vm98, %v330, 0
    %344 = vmatpush.bf16.msra.mxu0 0
    %345 = vmatpush.bf16.msra.mxu0 0
    %346 = vmatpush.bf16.msra.mxu0 0
    %347 = vmatpush.bf16.msra.mxu0 0
    %348 = vmatpush.bf16.msra.mxu0 0
    %349 = vmatpush.bf16.msra.mxu0 0
    %350 = vmatpush.bf16.msra.mxu0 %v342
    %351 = vmatpush.bf16.msra.mxu0 %v329
    %352 = vmatmul.bf16.gmra.mxu0 %v333
    %v353 = vpop.f32.mrf.mxu0
    %v354 = vadd.f32 0.0, %v353
    %v355 = vpop.f32.mrf.mxu0
    %v356 = vadd.f32 0.0, %v355
    %357 = vmatmul.bf16.gmra.mxu0 %v336
    %v358 = vpop.f32.mrf.mxu0
    %v359 = vadd.f32 0.0, %v358
    %v360 = vpop.f32.mrf.mxu0
    %v361 = vadd.f32 0.0, %v360
    %362 = vmatmul.bf16.gmra.mxu0 %v339
    %v363 = vpop.f32.mrf.mxu0
    %v364 = vadd.f32 0.0, %v363
    %v365 = vpop.f32.mrf.mxu0
    %v366 = vadd.f32 0.0, %v365
    %367 = vdwg.mxu0
    %v368 = vadd.f32 %v301, %v354
    %v369 = vadd.f32 %v302, %v356
    %v370 = vadd.f32 %v303, %v359
    %v371 = vadd.f32 %v304, %v361
    %v372 = vadd.f32 %v305, %v364
    %v373 = vadd.f32 %v306, %v366
    %v374 = vld [vmem:[%s2] sm:$0x1]
    %v376 = vperm.slane %v374, 0
    %v378 = vadd.f32 %v368, %v376
    %v379 = vadd.f32 %v369, %v376
    %v380 = vadd.f32 %v370, %v376
    %v381 = vadd.f32 %v371, %v376
    %v382 = vadd.f32 %v372, %v376
    %v383 = vadd.f32 %v373, %v376
    %v384 = vmax.f32 %v378, 0.0
    %v385 = vmax.f32 %v379, 0.0
    %v386 = vmax.f32 %v380, 0.0
    %v387 = vmax.f32 %v381, 0.0
    %v388 = vmax.f32 %v382, 0.0
    %v389 = vmax.f32 %v383, 0.0
    %396 = vrot.lane.b32.xlu0 %v384, 127
    %v397 = vpop.permute.xlu0 %396
    %398 = vrot.lane.b32.xlu0 %v385, 127
    %v399 = vpop.permute.xlu0 %398
    %400 = vrot.lane.b32.xlu0 %v386, 127
    %v401 = vpop.permute.xlu0 %400
    %402 = vrot.lane.b32.xlu0 %v387, 127
    %v403 = vpop.permute.xlu0 %402
    %404 = vrot.lane.b32.xlu0 %v388, 127
    %v405 = vpop.permute.xlu0 %404
    %406 = vrot.lane.b32.xlu0 %v389, 127
    %v407 = vpop.permute.xlu0 %406
    %v414 = vmax.f32 %v384, %v397
    %v415 = vmax.f32 %v385, %v399
    %v416 = vmax.f32 %v386, %v401
    %v417 = vmax.f32 %v387, %v403
    %v418 = vmax.f32 %v388, %v405
    %v419 = vmax.f32 %v389, %v407
    %420 = vst [vmem:[#allocation2] sm:$0xff] %v414
    %421 = vst [vmem:[#allocation2 + $0x8] sm:$0xff] %v415
    %422 = vst [vmem:[#allocation2 + $0x10] sm:$0xff] %v416
    %423 = vst [vmem:[#allocation2 + $0x18] sm:$0xff] %v417
    %424 = vst [vmem:[#allocation2 + $0x20] sm:$0xff] %v418
    %425 = vst [vmem:[#allocation2 + $0x28] sm:$0xff] %v419
    %v426 = vld [vmem:[#allocation2] ss:$2 sm:$0xff]
    %s427 = scalar_lea.vmem [#allocation2], 16
    %v428 = vld [vmem:[%s427] ss:$2 sm:$0xf]
    %s429 = scalar_lea.vmem [#allocation2], 24
    %v430 = vld [vmem:[%s429] ss:$2 sm:$0xff]
    %s431 = scalar_lea.vmem [#allocation2], 40
    %v432 = vld [vmem:[%s431] ss:$2 sm:$0xf]
    %s433 = scalar_lea.vmem [#allocation2], 1
    %v434 = vld [vmem:[%s433] ss:$2 sm:$0xff]
    %s435 = scalar_lea.vmem [#allocation2], 17
    %v436 = vld [vmem:[%s435] ss:$2 sm:$0xf]
    %s437 = scalar_lea.vmem [#allocation2], 25
    %v438 = vld [vmem:[%s437] ss:$2 sm:$0xff]
    %s439 = scalar_lea.vmem [#allocation2], 41
    %v440 = vld [vmem:[%s439] ss:$2 sm:$0xf]
    %v441 = vmax.f32 %v426, %v434
    %v442 = vmax.f32 %v428, %v436
    %v443 = vmax.f32 %v430, %v438
    %v444 = vmax.f32 %v432, %v440
    %445 = vst [vmem:[#allocation3] sm:$0xff] %v441
    %446 = vst [vmem:[#allocation3 + $0x8] sm:$0xf] %v442
    %447 = vst [vmem:[#allocation3 + $0x10] sm:$0xff] %v443
    %448 = vst [vmem:[#allocation3 + $0x18] sm:$0xf] %v444
    %v449 = vld [vmem:[#allocation3] sm:$0xff]
    %v450 = vld [vmem:[#allocation3 + $0x10] sm:$0xff]
    %v451 = vpack.c.bf16 %v450, %v449
    %v452 = vld [vmem:[%s3] sm:$0xf]
    %v453 = vld [vmem:[%s3 + $0x4] sm:$0xf]
    %v454 = vld [vmem:[%s3 + $0x8] sm:$0xf]
    %v455 = vld [vmem:[%s3 + $0xc] sm:$0xf]
    %v456 = vld [vmem:[%s3 + $0x10] sm:$0xf]
    %v457 = vld [vmem:[%s3 + $0x14] sm:$0xf]
    %v458 = vld [vmem:[%s3 + $0x18] sm:$0xf]
    %v459 = vld [vmem:[%s3 + $0x1c] sm:$0xf]
    %v460 = vld [vmem:[%s3 + $0x20] sm:$0xf]
    %v461 = vld [vmem:[%s3 + $0x24] sm:$0xf]
    %v462 = vld [vmem:[%s3 + $0x28] sm:$0xf]
    %v463 = vld [vmem:[%s3 + $0x2c] sm:$0xf]
    %v464 = vld [vmem:[%s3 + $0x30] sm:$0xf]
    %v465 = vld [vmem:[%s3 + $0x34] sm:$0xf]
    %v466 = vld [vmem:[%s3 + $0x38] sm:$0xf]
    %v467 = vld [vmem:[%s3 + $0x3c] sm:$0xf]
    %v468 = vld [vmem:[#allocation3 + $0x1] sm:$0xff]
    %v469 = vld [vmem:[#allocation3 + $0x11] sm:$0xff]
    %v470 = vpack.c.bf16 %v469, %v468
    %s471 = scalar_lea.vmem %s3, 64
    %v472 = vld [vmem:[%s471] sm:$0xf]
    %v473 = vld [vmem:[%s471 + $0x4] sm:$0xf]
    %v474 = vld [vmem:[%s471 + $0x8] sm:$0xf]
    %v475 = vld [vmem:[%s471 + $0xc] sm:$0xf]
    %v476 = vld [vmem:[%s471 + $0x10] sm:$0xf]
    %v477 = vld [vmem:[%s471 + $0x14] sm:$0xf]
    %v478 = vld [vmem:[%s471 + $0x18] sm:$0xf]
    %v479 = vld [vmem:[%s471 + $0x1c] sm:$0xf]
    %v480 = vld [vmem:[%s471 + $0x20] sm:$0xf]
    %v481 = vld [vmem:[%s471 + $0x24] sm:$0xf]
    %v482 = vld [vmem:[%s471 + $0x28] sm:$0xf]
    %v483 = vld [vmem:[%s471 + $0x2c] sm:$0xf]
    %v484 = vld [vmem:[%s471 + $0x30] sm:$0xf]
    %v485 = vld [vmem:[%s471 + $0x34] sm:$0xf]
    %v486 = vld [vmem:[%s471 + $0x38] sm:$0xf]
    %v487 = vld [vmem:[%s471 + $0x3c] sm:$0xf]
    %v504 = vunpack.c.l.b16 %v472
    %v505 = vunpack.c.l.b16 %v473
    %v506 = vunpack.c.l.b16 %v474
    %v507 = vunpack.c.l.b16 %v475
    %v508 = vunpack.c.l.b16 %v476
    %v509 = vunpack.c.l.b16 %v477
    %v510 = vunpack.c.l.b16 %v478
    %v511 = vunpack.c.l.b16 %v479
    %v512 = vunpack.c.l.b16 %v480
    %v513 = vunpack.c.l.b16 %v481
    %v514 = vunpack.c.l.b16 %v482
    %v515 = vunpack.c.l.b16 %v483
    %v516 = vunpack.c.l.b16 %v484
    %v517 = vunpack.c.l.b16 %v485
    %v518 = vunpack.c.l.b16 %v486
    %v519 = vunpack.c.l.b16 %v487
    %v520 = vpack.c.b16 %v505, %v504
    %v521 = vpack.c.b16 %v507, %v506
    %v522 = vpack.c.b16 %v509, %v508
    %v523 = vpack.c.b16 %v511, %v510
    %v524 = vpack.c.b16 %v513, %v512
    %v525 = vpack.c.b16 %v515, %v514
    %v526 = vpack.c.b16 %v517, %v516
    %v527 = vpack.c.b16 %v519, %v518
    %536 = vmatpush.bf16.msra.mxu0 %v527
    %537 = vmatpush.bf16.msra.mxu0 %v526
    %538 = vmatpush.bf16.msra.mxu0 %v525
    %539 = vmatpush.bf16.msra.mxu0 %v524
    %540 = vmatpush.bf16.msra.mxu0 %v523
    %541 = vmatpush.bf16.msra.mxu0 %v522
    %542 = vmatpush.bf16.msra.mxu0 %v521
    %543 = vmatpush.bf16.msra.mxu0 %v520
    %544 = vmatmul.bf16.gmra.mxu0 %v470
    %v545 = vpop.f32.mrf.mxu0
    %v546 = vadd.f32 0.0, %v545
    %v547 = vpop.f32.mrf.mxu0
    %v548 = vadd.f32 0.0, %v547
    %549 = vdwg.mxu0
    %v566 = vunpack.c.l.b16 %v452
    %v567 = vunpack.c.l.b16 %v453
    %v568 = vunpack.c.l.b16 %v454
    %v569 = vunpack.c.l.b16 %v455
    %v570 = vunpack.c.l.b16 %v456
    %v571 = vunpack.c.l.b16 %v457
    %v572 = vunpack.c.l.b16 %v458
    %v573 = vunpack.c.l.b16 %v459
    %v574 = vunpack.c.l.b16 %v460
    %v575 = vunpack.c.l.b16 %v461
    %v576 = vunpack.c.l.b16 %v462
    %v577 = vunpack.c.l.b16 %v463
    %v578 = vunpack.c.l.b16 %v464
    %v579 = vunpack.c.l.b16 %v465
    %v580 = vunpack.c.l.b16 %v466
    %v581 = vunpack.c.l.b16 %v467
    %v582 = vpack.c.b16 %v567, %v566
    %v583 = vpack.c.b16 %v569, %v568
    %v584 = vpack.c.b16 %v571, %v570
    %v585 = vpack.c.b16 %v573, %v572
    %v586 = vpack.c.b16 %v575, %v574
    %v587 = vpack.c.b16 %v577, %v576
    %v588 = vpack.c.b16 %v579, %v578
    %v589 = vpack.c.b16 %v581, %v580
    %598 = vmatpush.bf16.msra.mxu0 %v589
    %599 = vmatpush.bf16.msra.mxu0 %v588
    %600 = vmatpush.bf16.msra.mxu0 %v587
    %601 = vmatpush.bf16.msra.mxu0 %v586
    %602 = vmatpush.bf16.msra.mxu0 %v585
    %603 = vmatpush.bf16.msra.mxu0 %v584
    %604 = vmatpush.bf16.msra.mxu0 %v583
    %605 = vmatpush.bf16.msra.mxu0 %v582
    %606 = vmatmul.bf16.gmra.mxu0 %v451
    %v607 = vpop.f32.mrf.mxu0
    %v608 = vadd.f32 %v546, %v607
    %v609 = vpop.f32.mrf.mxu0
    %v610 = vadd.f32 %v548, %v609
    %611 = vdwg.mxu0
    %v612 = vld [vmem:[#allocation3 + $0x2] sm:$0xff]
    %v613 = vld [vmem:[#allocation3 + $0x12] sm:$0xff]
    %v614 = vpack.c.bf16 %v613, %v612
    %s615 = scalar_lea.vmem %s3, 128
    %v616 = vld [vmem:[%s615] sm:$0xf]
    %v617 = vld [vmem:[%s615 + $0x4] sm:$0xf]
    %v618 = vld [vmem:[%s615 + $0x8] sm:$0xf]
    %v619 = vld [vmem:[%s615 + $0xc] sm:$0xf]
    %v620 = vld [vmem:[%s615 + $0x10] sm:$0xf]
    %v621 = vld [vmem:[%s615 + $0x14] sm:$0xf]
    %v622 = vld [vmem:[%s615 + $0x18] sm:$0xf]
    %v623 = vld [vmem:[%s615 + $0x1c] sm:$0xf]
    %v624 = vld [vmem:[%s615 + $0x20] sm:$0xf]
    %v625 = vld [vmem:[%s615 + $0x24] sm:$0xf]
    %v626 = vld [vmem:[%s615 + $0x28] sm:$0xf]
    %v627 = vld [vmem:[%s615 + $0x2c] sm:$0xf]
    %v628 = vld [vmem:[%s615 + $0x30] sm:$0xf]
    %v629 = vld [vmem:[%s615 + $0x34] sm:$0xf]
    %v630 = vld [vmem:[%s615 + $0x38] sm:$0xf]
    %v631 = vld [vmem:[%s615 + $0x3c] sm:$0xf]
    %v648 = vunpack.c.l.b16 %v616
    %v649 = vunpack.c.l.b16 %v617
    %v650 = vunpack.c.l.b16 %v618
    %v651 = vunpack.c.l.b16 %v619
    %v652 = vunpack.c.l.b16 %v620
    %v653 = vunpack.c.l.b16 %v621
    %v654 = vunpack.c.l.b16 %v622
    %v655 = vunpack.c.l.b16 %v623
    %v656 = vunpack.c.l.b16 %v624
    %v657 = vunpack.c.l.b16 %v625
    %v658 = vunpack.c.l.b16 %v626
    %v659 = vunpack.c.l.b16 %v627
    %v660 = vunpack.c.l.b16 %v628
    %v661 = vunpack.c.l.b16 %v629
    %v662 = vunpack.c.l.b16 %v630
    %v663 = vunpack.c.l.b16 %v631
    %v664 = vpack.c.b16 %v649, %v648
    %v665 = vpack.c.b16 %v651, %v650
    %v666 = vpack.c.b16 %v653, %v652
    %v667 = vpack.c.b16 %v655, %v654
    %v668 = vpack.c.b16 %v657, %v656
    %v669 = vpack.c.b16 %v659, %v658
    %v670 = vpack.c.b16 %v661, %v660
    %v671 = vpack.c.b16 %v663, %v662
    %680 = vmatpush.bf16.msra.mxu0 %v671
    %681 = vmatpush.bf16.msra.mxu0 %v670
    %682 = vmatpush.bf16.msra.mxu0 %v669
    %683 = vmatpush.bf16.msra.mxu0 %v668
    %684 = vmatpush.bf16.msra.mxu0 %v667
    %685 = vmatpush.bf16.msra.mxu0 %v666
    %686 = vmatpush.bf16.msra.mxu0 %v665
    %687 = vmatpush.bf16.msra.mxu0 %v664
    %688 = vmatmul.bf16.gmra.mxu0 %v614
    %v689 = vpop.f32.mrf.mxu0
    %v690 = vadd.f32 0.0, %v689
    %v691 = vpop.f32.mrf.mxu0
    %v692 = vadd.f32 0.0, %v691
    %693 = vdwg.mxu0
    %v694 = vadd.f32 %v608, %v690
    %v695 = vadd.f32 %v610, %v692
    %v696 = vld [vmem:[#allocation3 + $0x3] sm:$0xff]
    %v697 = vld [vmem:[#allocation3 + $0x13] sm:$0xff]
    %v698 = vpack.c.bf16 %v697, %v696
    %s699 = scalar_lea.vmem %s3, 192
    %v700 = vld [vmem:[%s699] sm:$0xf]
    %v701 = vld [vmem:[%s699 + $0x4] sm:$0xf]
    %v702 = vld [vmem:[%s699 + $0x8] sm:$0xf]
    %v703 = vld [vmem:[%s699 + $0xc] sm:$0xf]
    %v704 = vld [vmem:[%s699 + $0x10] sm:$0xf]
    %v705 = vld [vmem:[%s699 + $0x14] sm:$0xf]
    %v706 = vld [vmem:[%s699 + $0x18] sm:$0xf]
    %v707 = vld [vmem:[%s699 + $0x1c] sm:$0xf]
    %v708 = vld [vmem:[%s699 + $0x20] sm:$0xf]
    %v709 = vld [vmem:[%s699 + $0x24] sm:$0xf]
    %v710 = vld [vmem:[%s699 + $0x28] sm:$0xf]
    %v711 = vld [vmem:[%s699 + $0x2c] sm:$0xf]
    %v712 = vld [vmem:[%s699 + $0x30] sm:$0xf]
    %v713 = vld [vmem:[%s699 + $0x34] sm:$0xf]
    %v714 = vld [vmem:[%s699 + $0x38] sm:$0xf]
    %v715 = vld [vmem:[%s699 + $0x3c] sm:$0xf]
    %v732 = vunpack.c.l.b16 %v700
    %v733 = vunpack.c.l.b16 %v701
    %v734 = vunpack.c.l.b16 %v702
    %v735 = vunpack.c.l.b16 %v703
    %v736 = vunpack.c.l.b16 %v704
    %v737 = vunpack.c.l.b16 %v705
    %v738 = vunpack.c.l.b16 %v706
    %v739 = vunpack.c.l.b16 %v707
    %v740 = vunpack.c.l.b16 %v708
    %v741 = vunpack.c.l.b16 %v709
    %v742 = vunpack.c.l.b16 %v710
    %v743 = vunpack.c.l.b16 %v711
    %v744 = vunpack.c.l.b16 %v712
    %v745 = vunpack.c.l.b16 %v713
    %v746 = vunpack.c.l.b16 %v714
    %v747 = vunpack.c.l.b16 %v715
    %v748 = vpack.c.b16 %v733, %v732
    %v749 = vpack.c.b16 %v735, %v734
    %v750 = vpack.c.b16 %v737, %v736
    %v751 = vpack.c.b16 %v739, %v738
    %v752 = vpack.c.b16 %v741, %v740
    %v753 = vpack.c.b16 %v743, %v742
    %v754 = vpack.c.b16 %v745, %v744
    %v755 = vpack.c.b16 %v747, %v746
    %764 = vmatpush.bf16.msra.mxu0 %v755
    %765 = vmatpush.bf16.msra.mxu0 %v754
    %766 = vmatpush.bf16.msra.mxu0 %v753
    %767 = vmatpush.bf16.msra.mxu0 %v752
    %768 = vmatpush.bf16.msra.mxu0 %v751
    %769 = vmatpush.bf16.msra.mxu0 %v750
    %770 = vmatpush.bf16.msra.mxu0 %v749
    %771 = vmatpush.bf16.msra.mxu0 %v748
    %772 = vmatmul.bf16.gmra.mxu0 %v698
    %v773 = vpop.f32.mrf.mxu0
    %v774 = vadd.f32 0.0, %v773
    %v775 = vpop.f32.mrf.mxu0
    %v776 = vadd.f32 0.0, %v775
    %777 = vdwg.mxu0
    %v778 = vadd.f32 %v694, %v774
    %v779 = vadd.f32 %v695, %v776
    %v780 = vld [vmem:[#allocation3 + $0x4] sm:$0xff]
    %v781 = vld [vmem:[#allocation3 + $0x14] sm:$0xff]
    %v782 = vpack.c.bf16 %v781, %v780
    %s783 = scalar_lea.vmem %s3, 256
    %v784 = vld [vmem:[%s783] sm:$0xf]
    %v785 = vld [vmem:[%s783 + $0x4] sm:$0xf]
    %v786 = vld [vmem:[%s783 + $0x8] sm:$0xf]
    %v787 = vld [vmem:[%s783 + $0xc] sm:$0xf]
    %v788 = vld [vmem:[%s783 + $0x10] sm:$0xf]
    %v789 = vld [vmem:[%s783 + $0x14] sm:$0xf]
    %v790 = vld [vmem:[%s783 + $0x18] sm:$0xf]
    %v791 = vld [vmem:[%s783 + $0x1c] sm:$0xf]
    %v792 = vld [vmem:[%s783 + $0x20] sm:$0xf]
    %v793 = vld [vmem:[%s783 + $0x24] sm:$0xf]
    %v794 = vld [vmem:[%s783 + $0x28] sm:$0xf]
    %v795 = vld [vmem:[%s783 + $0x2c] sm:$0xf]
    %v796 = vld [vmem:[%s783 + $0x30] sm:$0xf]
    %v797 = vld [vmem:[%s783 + $0x34] sm:$0xf]
    %v798 = vld [vmem:[%s783 + $0x38] sm:$0xf]
    %v799 = vld [vmem:[%s783 + $0x3c] sm:$0xf]
    %v816 = vunpack.c.l.b16 %v784
    %v817 = vunpack.c.l.b16 %v785
    %v818 = vunpack.c.l.b16 %v786
    %v819 = vunpack.c.l.b16 %v787
    %v820 = vunpack.c.l.b16 %v788
    %v821 = vunpack.c.l.b16 %v789
    %v822 = vunpack.c.l.b16 %v790
    %v823 = vunpack.c.l.b16 %v791
    %v824 = vunpack.c.l.b16 %v792
    %v825 = vunpack.c.l.b16 %v793
    %v826 = vunpack.c.l.b16 %v794
    %v827 = vunpack.c.l.b16 %v795
    %v828 = vunpack.c.l.b16 %v796
    %v829 = vunpack.c.l.b16 %v797
    %v830 = vunpack.c.l.b16 %v798
    %v831 = vunpack.c.l.b16 %v799
    %v832 = vpack.c.b16 %v817, %v816
    %v833 = vpack.c.b16 %v819, %v818
    %v834 = vpack.c.b16 %v821, %v820
    %v835 = vpack.c.b16 %v823, %v822
    %v836 = vpack.c.b16 %v825, %v824
    %v837 = vpack.c.b16 %v827, %v826
    %v838 = vpack.c.b16 %v829, %v828
    %v839 = vpack.c.b16 %v831, %v830
    %848 = vmatpush.bf16.msra.mxu0 %v839
    %849 = vmatpush.bf16.msra.mxu0 %v838
    %850 = vmatpush.bf16.msra.mxu0 %v837
    %851 = vmatpush.bf16.msra.mxu0 %v836
    %852 = vmatpush.bf16.msra.mxu0 %v835
    %853 = vmatpush.bf16.msra.mxu0 %v834
    %854 = vmatpush.bf16.msra.mxu0 %v833
    %855 = vmatpush.bf16.msra.mxu0 %v832
    %856 = vmatmul.bf16.gmra.mxu0 %v782
    %v857 = vpop.f32.mrf.mxu0
    %v858 = vadd.f32 0.0, %v857
    %v859 = vpop.f32.mrf.mxu0
    %v860 = vadd.f32 0.0, %v859
    %861 = vdwg.mxu0
    %v862 = vadd.f32 %v778, %v858
    %v863 = vadd.f32 %v779, %v860
    %v864 = vld [vmem:[%s4] sm:$0x1]
    %v866 = vperm.slane %v864, 0
    %v868 = vadd.f32 %v862, %v866
    %v869 = vadd.f32 %v863, %v866
    %v870 = vmax.f32 %v868, 0.0
    %v871 = vmax.f32 %v869, 0.0
    %874 = vrot.lane.b32.xlu0 %v870, 127
    %v875 = vpop.permute.xlu0 %874
    %876 = vrot.lane.b32.xlu0 %v871, 127
    %v877 = vpop.permute.xlu0 %876
    %v880 = vmax.f32 %v870, %v875
    %v881 = vmax.f32 %v871, %v877
    %882 = vst [vmem:[#allocation4] sm:$0xff] %v880
    %883 = vst [vmem:[#allocation4 + $0x8] sm:$0xff] %v881
    %v884 = vld [vmem:[#allocation4] ss:$2 sm:$0xf]
    %s885 = scalar_lea.vmem [#allocation4], 8
    %v886 = vld [vmem:[%s885] ss:$2 sm:$0xf]
    %s887 = scalar_lea.vmem [#allocation4], 1
    %v888 = vld [vmem:[%s887] ss:$2 sm:$0xf]
    %s889 = scalar_lea.vmem [#allocation4], 9
    %v890 = vld [vmem:[%s889] ss:$2 sm:$0xf]
    %v891 = vmax.f32 %v884, %v888
    %v892 = vmax.f32 %v886, %v890
    %vm895 = vcmask 1044484
    %v896 = vsel %vm895, %v891, %v891
    %vm897 = vcmask 1046534
    %v898 = vsel %vm897, %v891, %v896
    %v899 = vrot.slane %v892, 7
    %vm900 = vcmask 1041409
    %v901 = vsel %vm900, %v899, %v898
    %vm902 = vcmask 1043459
    %v903 = vsel %vm902, %v899, %v901
    %vm904 = vcmask 1045509
    %v905 = vsel %vm904, %v899, %v903
    %vm906 = vcmask 1047559
    %v907 = vsel %vm906, %v899, %v905
    %909 = vst [vmem:[#allocation5] sm:$0x3] %v907
    %v910 = vrot.slane %v891, 1
    %v911 = vsel %vm895, %v910, %v910
    %v912 = vsel %vm897, %v910, %v911
    %v913 = vsel %vm900, %v892, %v912
    %v914 = vsel %vm902, %v892, %v913
    %v915 = vsel %vm904, %v892, %v914
    %v916 = vsel %vm906, %v892, %v915
    %918 = vst [vmem:[#allocation5 + $0x2] sm:$0x3] %v916
    %919 = vst.sshfl [vmem:[#allocation1] sm:$0xff pattern:$0x73625140] %v891
    %s920 = scalar_lea.vmem [#allocation1], 1
    %v921 = vld [vmem:[%s920] ss:$4 sm:$0xff]
    %922 = vst.sshfl [vmem:[#allocation1 + $0x20] sm:$0xff pattern:$0x73625140] %v892
    %s923 = scalar_lea.vmem [#allocation1], 33
    %v924 = vld [vmem:[%s923] ss:$4 sm:$0xff]
    %v925 = vsel %vm895, %v921, %v921
    %v926 = vsel %vm897, %v921, %v925
    %v927 = vrot.slane %v924, 7
    %v928 = vsel %vm900, %v927, %v926
    %v929 = vsel %vm902, %v927, %v928
    %v930 = vsel %vm904, %v927, %v929
    %v931 = vsel %vm906, %v927, %v930
    %933 = vst [vmem:[#allocation5 + $0x4] sm:$0x3] %v931
    %934 = vst.sshfl [vmem:[#allocation1] sm:$0xff pattern:$0x73625140] %v891
    %s935 = scalar_lea.vmem [#allocation1], 1
    %v936 = vld [vmem:[%s935] ss:$4 sm:$0xff]
    %937 = vst.sshfl [vmem:[#allocation1 + $0x20] sm:$0xff pattern:$0x73625140] %v892
    %s938 = scalar_lea.vmem [#allocation1], 33
    %v939 = vld [vmem:[%s938] ss:$4 sm:$0xff]
    %v940 = vrot.slane %v936, 1
    %v941 = vsel %vm895, %v940, %v940
    %v942 = vsel %vm897, %v940, %v941
    %v943 = vsel %vm900, %v939, %v942
    %v944 = vsel %vm902, %v939, %v943
    %v945 = vsel %vm904, %v939, %v944
    %v946 = vsel %vm906, %v939, %v945
    %948 = vst [vmem:[#allocation5 + $0x6] sm:$0x3] %v946
    %v949 = vld [vmem:[#allocation5] sm:$0xff]
    %951 = vst [vmem:[#allocation1] ss:$4 sm:$0xff] %v949
    %v952 = vld.sshfl [vmem:[#allocation1] sm:$0xff pattern:$0x73625140]
    %v953 = vld.sshfl [vmem:[#allocation1 + $0x8] sm:$0xff pattern:$0x73625140]
    %v954 = vld.sshfl [vmem:[#allocation1 + $0x10] sm:$0xff pattern:$0x73625140]
    %v955 = vld.sshfl [vmem:[#allocation1 + $0x18] sm:$0xff pattern:$0x73625140]
    %v960 = vpack.c.bf16 %v952, %v952
    %v961 = vpack.c.bf16 %v953, %v953
    %v962 = vpack.c.bf16 %v954, %v954
    %v963 = vpack.c.bf16 %v955, %v955
    %v964 = vld [vmem:[#allocation6] sm:$0xff]
    %v965 = vld [vmem:[#allocation6 + $0x8] sm:$0xff]
    %v966 = vld [vmem:[#allocation6 + $0x10] sm:$0xff]
    %v967 = vld [vmem:[#allocation6 + $0x18] sm:$0xff]
    %v968 = vld [vmem:[#allocation6 + $0x20] sm:$0xff]
    %v969 = vld [vmem:[#allocation6 + $0x28] sm:$0xff]
    %v970 = vld [vmem:[#allocation6 + $0x30] sm:$0xff]
    %v971 = vld [vmem:[#allocation6 + $0x38] sm:$0xff]
    %v972 = vld [vmem:[#allocation6 + $0x40] sm:$0xff]
    %v973 = vld [vmem:[#allocation6 + $0x48] sm:$0xff]
    %v974 = vld [vmem:[#allocation6 + $0x50] sm:$0xff]
    %v975 = vld [vmem:[#allocation6 + $0x58] sm:$0xff]
    %v976 = vld [vmem:[#allocation6 + $0x60] sm:$0xff]
    %v977 = vld [vmem:[#allocation6 + $0x68] sm:$0xff]
    %v978 = vld [vmem:[#allocation6 + $0x70] sm:$0xff]
    %v979 = vld [vmem:[#allocation6 + $0x78] sm:$0xff]
    %v980 = vld [vmem:[#allocation6 + $0x80] sm:$0xff]
    %v981 = vld [vmem:[#allocation6 + $0x88] sm:$0xff]
    %v982 = vld [vmem:[#allocation6 + $0x90] sm:$0xff]
    %v983 = vld [vmem:[#allocation6 + $0x98] sm:$0xff]
    %v984 = vld [vmem:[#allocation6 + $0xa0] sm:$0xff]
    %v985 = vld [vmem:[#allocation6 + $0xa8] sm:$0xff]
    %v986 = vld [vmem:[#allocation6 + $0xb0] sm:$0xff]
    %v987 = vld [vmem:[#allocation6 + $0xb8] sm:$0xff]
    %v988 = vld [vmem:[#allocation6 + $0xc0] sm:$0xff]
    %v989 = vld [vmem:[#allocation6 + $0xc8] sm:$0xff]
    %v990 = vld [vmem:[#allocation6 + $0xd0] sm:$0xff]
    %v991 = vld [vmem:[#allocation6 + $0xd8] sm:$0xff]
    %v992 = vld [vmem:[#allocation6 + $0xe0] sm:$0xff]
    %v993 = vld [vmem:[#allocation6 + $0xe8] sm:$0xff]
    %v994 = vld [vmem:[#allocation6 + $0xf0] sm:$0xff]
    %v995 = vld [vmem:[#allocation6 + $0xf8] sm:$0xff]
    %v996 = vld [vmem:[#allocation6 + $0x100] sm:$0xff]
    %v997 = vld [vmem:[#allocation6 + $0x108] sm:$0xff]
    %v998 = vld [vmem:[#allocation6 + $0x110] sm:$0xff]
    %v999 = vld [vmem:[#allocation6 + $0x118] sm:$0xff]
    %v1000 = vld [vmem:[#allocation6 + $0x120] sm:$0xff]
    %v1001 = vld [vmem:[#allocation6 + $0x128] sm:$0xff]
    %v1002 = vld [vmem:[#allocation6 + $0x130] sm:$0xff]
    %v1003 = vld [vmem:[#allocation6 + $0x138] sm:$0xff]
    %v1004 = vld [vmem:[#allocation6 + $0x140] sm:$0xff]
    %v1005 = vld [vmem:[#allocation6 + $0x148] sm:$0xff]
    %v1006 = vld [vmem:[#allocation6 + $0x150] sm:$0xff]
    %v1007 = vld [vmem:[#allocation6 + $0x158] sm:$0xff]
    %v1008 = vld [vmem:[#allocation6 + $0x160] sm:$0xff]
    %v1009 = vld [vmem:[#allocation6 + $0x168] sm:$0xff]
    %v1010 = vld [vmem:[#allocation6 + $0x170] sm:$0xff]
    %v1011 = vld [vmem:[#allocation6 + $0x178] sm:$0xff]
    %v1012 = vld [vmem:[#allocation6 + $0x180] sm:$0xff]
    %v1013 = vld [vmem:[#allocation6 + $0x188] sm:$0xff]
    %v1014 = vld [vmem:[#allocation6 + $0x190] sm:$0xff]
    %v1015 = vld [vmem:[#allocation6 + $0x198] sm:$0xff]
    %v1016 = vld [vmem:[#allocation6 + $0x1a0] sm:$0xff]
    %v1017 = vld [vmem:[#allocation6 + $0x1a8] sm:$0xff]
    %v1018 = vld [vmem:[#allocation6 + $0x1b0] sm:$0xff]
    %v1019 = vld [vmem:[#allocation6 + $0x1b8] sm:$0xff]
    %v1020 = vld [vmem:[#allocation6 + $0x1c0] sm:$0xff]
    %v1021 = vld [vmem:[#allocation6 + $0x1c8] sm:$0xff]
    %v1022 = vld [vmem:[#allocation6 + $0x1d0] sm:$0xff]
    %v1023 = vld [vmem:[#allocation6 + $0x1d8] sm:$0xff]
    %v1024 = vld [vmem:[#allocation6 + $0x1e0] sm:$0xff]
    %v1025 = vld [vmem:[#allocation6 + $0x1e8] sm:$0xff]
    %v1026 = vld [vmem:[#allocation6 + $0x1f0] sm:$0xff]
    %v1027 = vld [vmem:[#allocation6 + $0x1f8] sm:$0xff]
    %v1028 = vld [vmem:[#allocation6 + $0x200] sm:$0xff]
    %v1029 = vld [vmem:[#allocation6 + $0x208] sm:$0xff]
    %v1030 = vld [vmem:[#allocation6 + $0x210] sm:$0xff]
    %v1031 = vld [vmem:[#allocation6 + $0x218] sm:$0xff]
    %v1032 = vld [vmem:[#allocation6 + $0x220] sm:$0xff]
    %v1033 = vld [vmem:[#allocation6 + $0x228] sm:$0xff]
    %v1034 = vld [vmem:[#allocation6 + $0x230] sm:$0xff]
    %v1035 = vld [vmem:[#allocation6 + $0x238] sm:$0xff]
    %v1036 = vld [vmem:[#allocation6 + $0x240] sm:$0xff]
    %v1037 = vld [vmem:[#allocation6 + $0x248] sm:$0xff]
    %v1038 = vld [vmem:[#allocation6 + $0x250] sm:$0xff]
    %v1039 = vld [vmem:[#allocation6 + $0x258] sm:$0xff]
    %v1040 = vld [vmem:[#allocation6 + $0x260] sm:$0xff]
    %v1041 = vld [vmem:[#allocation6 + $0x268] sm:$0xff]
    %v1042 = vld [vmem:[#allocation6 + $0x270] sm:$0xff]
    %v1043 = vld [vmem:[#allocation6 + $0x278] sm:$0xff]
    %v1044 = vld [vmem:[#allocation6 + $0x280] sm:$0xff]
    %v1045 = vld [vmem:[#allocation6 + $0x288] sm:$0xff]
    %v1046 = vld [vmem:[#allocation6 + $0x290] sm:$0xff]
    %v1047 = vld [vmem:[#allocation6 + $0x298] sm:$0xff]
    %v1048 = vld [vmem:[#allocation6 + $0x2a0] sm:$0xff]
    %v1049 = vld [vmem:[#allocation6 + $0x2a8] sm:$0xff]
    %v1050 = vld [vmem:[#allocation6 + $0x2b0] sm:$0xff]
    %v1051 = vld [vmem:[#allocation6 + $0x2b8] sm:$0xff]
    %v1052 = vld [vmem:[#allocation6 + $0x2c0] sm:$0xff]
    %v1053 = vld [vmem:[#allocation6 + $0x2c8] sm:$0xff]
    %v1054 = vld [vmem:[#allocation6 + $0x2d0] sm:$0xff]
    %v1055 = vld [vmem:[#allocation6 + $0x2d8] sm:$0xff]
    %v1056 = vld [vmem:[#allocation6 + $0x2e0] sm:$0xff]
    %v1057 = vld [vmem:[#allocation6 + $0x2e8] sm:$0xff]
    %v1058 = vld [vmem:[#allocation6 + $0x2f0] sm:$0xff]
    %v1059 = vld [vmem:[#allocation6 + $0x2f8] sm:$0xff]
    %v1060 = vld [vmem:[#allocation6 + $0x300] sm:$0xff]
    %v1061 = vld [vmem:[#allocation6 + $0x308] sm:$0xff]
    %v1062 = vld [vmem:[#allocation6 + $0x310] sm:$0xff]
    %v1063 = vld [vmem:[#allocation6 + $0x318] sm:$0xff]
    %v1064 = vld [vmem:[#allocation6 + $0x320] sm:$0xff]
    %v1065 = vld [vmem:[#allocation6 + $0x328] sm:$0xff]
    %v1066 = vld [vmem:[#allocation6 + $0x330] sm:$0xff]
    %v1067 = vld [vmem:[#allocation6 + $0x338] sm:$0xff]
    %v1068 = vld [vmem:[#allocation6 + $0x340] sm:$0xff]
    %v1069 = vld [vmem:[#allocation6 + $0x348] sm:$0xff]
    %v1070 = vld [vmem:[#allocation6 + $0x350] sm:$0xff]
    %v1071 = vld [vmem:[#allocation6 + $0x358] sm:$0xff]
    %v1072 = vld [vmem:[#allocation6 + $0x360] sm:$0xff]
    %v1073 = vld [vmem:[#allocation6 + $0x368] sm:$0xff]
    %v1074 = vld [vmem:[#allocation6 + $0x370] sm:$0xff]
    %v1075 = vld [vmem:[#allocation6 + $0x378] sm:$0xff]
    %v1076 = vld [vmem:[#allocation6 + $0x380] sm:$0xff]
    %v1077 = vld [vmem:[#allocation6 + $0x388] sm:$0xff]
    %v1078 = vld [vmem:[#allocation6 + $0x390] sm:$0xff]
    %v1079 = vld [vmem:[#allocation6 + $0x398] sm:$0xff]
    %v1080 = vld [vmem:[#allocation6 + $0x3a0] sm:$0xff]
    %v1081 = vld [vmem:[#allocation6 + $0x3a8] sm:$0xff]
    %v1082 = vld [vmem:[#allocation6 + $0x3b0] sm:$0xff]
    %v1083 = vld [vmem:[#allocation6 + $0x3b8] sm:$0xff]
    %v1084 = vld [vmem:[#allocation6 + $0x3c0] sm:$0xff]
    %v1085 = vld [vmem:[#allocation6 + $0x3c8] sm:$0xff]
    %v1086 = vld [vmem:[#allocation6 + $0x3d0] sm:$0xff]
    %v1087 = vld [vmem:[#allocation6 + $0x3d8] sm:$0xff]
    %v1088 = vld [vmem:[#allocation6 + $0x3e0] sm:$0xff]
    %v1089 = vld [vmem:[#allocation6 + $0x3e8] sm:$0xff]
    %v1090 = vld [vmem:[#allocation6 + $0x3f0] sm:$0xff]
    %v1091 = vld [vmem:[#allocation6 + $0x3f8] sm:$0xff]
    %v1092 = vld [vmem:[%s6] sm:$0xf]
    %v1094 = vperm.slane %v1092, 0
    %v1095 = vperm.slane %v1092, 1
    %v1096 = vperm.slane %v1092, 2
    %v1097 = vperm.slane %v1092, 3
    %v1230 = vunpack.c.l.b16 %v964
    %v1231 = vunpack.c.h.b16 %v964
    %v1232 = vunpack.c.l.b16 %v965
    %v1233 = vunpack.c.h.b16 %v965
    %v1234 = vunpack.c.l.b16 %v966
    %v1235 = vunpack.c.h.b16 %v966
    %v1236 = vunpack.c.l.b16 %v967
    %v1237 = vunpack.c.h.b16 %v967
    %v1238 = vunpack.c.l.b16 %v968
    %v1239 = vunpack.c.h.b16 %v968
    %v1240 = vunpack.c.l.b16 %v969
    %v1241 = vunpack.c.h.b16 %v969
    %v1242 = vunpack.c.l.b16 %v970
    %v1243 = vunpack.c.h.b16 %v970
    %v1244 = vunpack.c.l.b16 %v971
    %v1245 = vunpack.c.h.b16 %v971
    %v1246 = vunpack.c.l.b16 %v972
    %v1247 = vunpack.c.h.b16 %v972
    %v1248 = vunpack.c.l.b16 %v973
    %v1249 = vunpack.c.h.b16 %v973
    %v1250 = vunpack.c.l.b16 %v974
    %v1251 = vunpack.c.h.b16 %v974
    %v1252 = vunpack.c.l.b16 %v975
    %v1253 = vunpack.c.h.b16 %v975
    %v1254 = vunpack.c.l.b16 %v976
    %v1255 = vunpack.c.h.b16 %v976
    %v1256 = vunpack.c.l.b16 %v977
    %v1257 = vunpack.c.h.b16 %v977
    %v1258 = vunpack.c.l.b16 %v978
    %v1259 = vunpack.c.h.b16 %v978
    %v1260 = vunpack.c.l.b16 %v979
    %v1261 = vunpack.c.h.b16 %v979
    %v1262 = vunpack.c.l.b16 %v980
    %v1263 = vunpack.c.h.b16 %v980
    %v1264 = vunpack.c.l.b16 %v981
    %v1265 = vunpack.c.h.b16 %v981
    %v1266 = vunpack.c.l.b16 %v982
    %v1267 = vunpack.c.h.b16 %v982
    %v1268 = vunpack.c.l.b16 %v983
    %v1269 = vunpack.c.h.b16 %v983
    %v1270 = vunpack.c.l.b16 %v984
    %v1271 = vunpack.c.h.b16 %v984
    %v1272 = vunpack.c.l.b16 %v985
    %v1273 = vunpack.c.h.b16 %v985
    %v1274 = vunpack.c.l.b16 %v986
    %v1275 = vunpack.c.h.b16 %v986
    %v1276 = vunpack.c.l.b16 %v987
    %v1277 = vunpack.c.h.b16 %v987
    %v1278 = vunpack.c.l.b16 %v988
    %v1279 = vunpack.c.h.b16 %v988
    %v1280 = vunpack.c.l.b16 %v989
    %v1281 = vunpack.c.h.b16 %v989
    %v1282 = vunpack.c.l.b16 %v990
    %v1283 = vunpack.c.h.b16 %v990
    %v1284 = vunpack.c.l.b16 %v991
    %v1285 = vunpack.c.h.b16 %v991
    %v1286 = vunpack.c.l.b16 %v992
    %v1287 = vunpack.c.h.b16 %v992
    %v1288 = vunpack.c.l.b16 %v993
    %v1289 = vunpack.c.h.b16 %v993
    %v1290 = vunpack.c.l.b16 %v994
    %v1291 = vunpack.c.h.b16 %v994
    %v1292 = vunpack.c.l.b16 %v995
    %v1293 = vunpack.c.h.b16 %v995
    %v1294 = vunpack.c.l.b16 %v996
    %v1295 = vunpack.c.h.b16 %v996
    %v1296 = vunpack.c.l.b16 %v997
    %v1297 = vunpack.c.h.b16 %v997
    %v1298 = vunpack.c.l.b16 %v998
    %v1299 = vunpack.c.h.b16 %v998
    %v1300 = vunpack.c.l.b16 %v999
    %v1301 = vunpack.c.h.b16 %v999
    %v1302 = vunpack.c.l.b16 %v1000
    %v1303 = vunpack.c.h.b16 %v1000
    %v1304 = vunpack.c.l.b16 %v1001
    %v1305 = vunpack.c.h.b16 %v1001
    %v1306 = vunpack.c.l.b16 %v1002
    %v1307 = vunpack.c.h.b16 %v1002
    %v1308 = vunpack.c.l.b16 %v1003
    %v1309 = vunpack.c.h.b16 %v1003
    %v1310 = vunpack.c.l.b16 %v1004
    %v1311 = vunpack.c.h.b16 %v1004
    %v1312 = vunpack.c.l.b16 %v1005
    %v1313 = vunpack.c.h.b16 %v1005
    %v1314 = vunpack.c.l.b16 %v1006
    %v1315 = vunpack.c.h.b16 %v1006
    %v1316 = vunpack.c.l.b16 %v1007
    %v1317 = vunpack.c.h.b16 %v1007
    %v1318 = vunpack.c.l.b16 %v1008
    %v1319 = vunpack.c.h.b16 %v1008
    %v1320 = vunpack.c.l.b16 %v1009
    %v1321 = vunpack.c.h.b16 %v1009
    %v1322 = vunpack.c.l.b16 %v1010
    %v1323 = vunpack.c.h.b16 %v1010
    %v1324 = vunpack.c.l.b16 %v1011
    %v1325 = vunpack.c.h.b16 %v1011
    %v1326 = vunpack.c.l.b16 %v1012
    %v1327 = vunpack.c.h.b16 %v1012
    %v1328 = vunpack.c.l.b16 %v1013
    %v1329 = vunpack.c.h.b16 %v1013
    %v1330 = vunpack.c.l.b16 %v1014
    %v1331 = vunpack.c.h.b16 %v1014
    %v1332 = vunpack.c.l.b16 %v1015
    %v1333 = vunpack.c.h.b16 %v1015
    %v1334 = vunpack.c.l.b16 %v1016
    %v1335 = vunpack.c.h.b16 %v1016
    %v1336 = vunpack.c.l.b16 %v1017
    %v1337 = vunpack.c.h.b16 %v1017
    %v1338 = vunpack.c.l.b16 %v1018
    %v1339 = vunpack.c.h.b16 %v1018
    %v1340 = vunpack.c.l.b16 %v1019
    %v1341 = vunpack.c.h.b16 %v1019
    %v1342 = vunpack.c.l.b16 %v1020
    %v1343 = vunpack.c.h.b16 %v1020
    %v1344 = vunpack.c.l.b16 %v1021
    %v1345 = vunpack.c.h.b16 %v1021
    %v1346 = vunpack.c.l.b16 %v1022
    %v1347 = vunpack.c.h.b16 %v1022
    %v1348 = vunpack.c.l.b16 %v1023
    %v1349 = vunpack.c.h.b16 %v1023
    %v1350 = vunpack.c.l.b16 %v1024
    %v1351 = vunpack.c.h.b16 %v1024
    %v1352 = vunpack.c.l.b16 %v1025
    %v1353 = vunpack.c.h.b16 %v1025
    %v1354 = vunpack.c.l.b16 %v1026
    %v1355 = vunpack.c.h.b16 %v1026
    %v1356 = vunpack.c.l.b16 %v1027
    %v1357 = vunpack.c.h.b16 %v1027
    %v1358 = vunpack.c.l.b16 %v1028
    %v1359 = vunpack.c.h.b16 %v1028
    %v1360 = vunpack.c.l.b16 %v1029
    %v1361 = vunpack.c.h.b16 %v1029
    %v1362 = vunpack.c.l.b16 %v1030
    %v1363 = vunpack.c.h.b16 %v1030
    %v1364 = vunpack.c.l.b16 %v1031
    %v1365 = vunpack.c.h.b16 %v1031
    %v1366 = vunpack.c.l.b16 %v1032
    %v1367 = vunpack.c.h.b16 %v1032
    %v1368 = vunpack.c.l.b16 %v1033
    %v1369 = vunpack.c.h.b16 %v1033
    %v1370 = vunpack.c.l.b16 %v1034
    %v1371 = vunpack.c.h.b16 %v1034
    %v1372 = vunpack.c.l.b16 %v1035
    %v1373 = vunpack.c.h.b16 %v1035
    %v1374 = vunpack.c.l.b16 %v1036
    %v1375 = vunpack.c.h.b16 %v1036
    %v1376 = vunpack.c.l.b16 %v1037
    %v1377 = vunpack.c.h.b16 %v1037
    %v1378 = vunpack.c.l.b16 %v1038
    %v1379 = vunpack.c.h.b16 %v1038
    %v1380 = vunpack.c.l.b16 %v1039
    %v1381 = vunpack.c.h.b16 %v1039
    %v1382 = vunpack.c.l.b16 %v1040
    %v1383 = vunpack.c.h.b16 %v1040
    %v1384 = vunpack.c.l.b16 %v1041
    %v1385 = vunpack.c.h.b16 %v1041
    %v1386 = vunpack.c.l.b16 %v1042
    %v1387 = vunpack.c.h.b16 %v1042
    %v1388 = vunpack.c.l.b16 %v1043
    %v1389 = vunpack.c.h.b16 %v1043
    %v1390 = vunpack.c.l.b16 %v1044
    %v1391 = vunpack.c.h.b16 %v1044
    %v1392 = vunpack.c.l.b16 %v1045
    %v1393 = vunpack.c.h.b16 %v1045
    %v1394 = vunpack.c.l.b16 %v1046
    %v1395 = vunpack.c.h.b16 %v1046
    %v1396 = vunpack.c.l.b16 %v1047
    %v1397 = vunpack.c.h.b16 %v1047
    %v1398 = vunpack.c.l.b16 %v1048
    %v1399 = vunpack.c.h.b16 %v1048
    %v1400 = vunpack.c.l.b16 %v1049
    %v1401 = vunpack.c.h.b16 %v1049
    %v1402 = vunpack.c.l.b16 %v1050
    %v1403 = vunpack.c.h.b16 %v1050
    %v1404 = vunpack.c.l.b16 %v1051
    %v1405 = vunpack.c.h.b16 %v1051
    %v1406 = vunpack.c.l.b16 %v1052
    %v1407 = vunpack.c.h.b16 %v1052
    %v1408 = vunpack.c.l.b16 %v1053
    %v1409 = vunpack.c.h.b16 %v1053
    %v1410 = vunpack.c.l.b16 %v1054
    %v1411 = vunpack.c.h.b16 %v1054
    %v1412 = vunpack.c.l.b16 %v1055
    %v1413 = vunpack.c.h.b16 %v1055
    %v1414 = vunpack.c.l.b16 %v1056
    %v1415 = vunpack.c.h.b16 %v1056
    %v1416 = vunpack.c.l.b16 %v1057
    %v1417 = vunpack.c.h.b16 %v1057
    %v1418 = vunpack.c.l.b16 %v1058
    %v1419 = vunpack.c.h.b16 %v1058
    %v1420 = vunpack.c.l.b16 %v1059
    %v1421 = vunpack.c.h.b16 %v1059
    %v1422 = vunpack.c.l.b16 %v1060
    %v1423 = vunpack.c.h.b16 %v1060
    %v1424 = vunpack.c.l.b16 %v1061
    %v1425 = vunpack.c.h.b16 %v1061
    %v1426 = vunpack.c.l.b16 %v1062
    %v1427 = vunpack.c.h.b16 %v1062
    %v1428 = vunpack.c.l.b16 %v1063
    %v1429 = vunpack.c.h.b16 %v1063
    %v1430 = vunpack.c.l.b16 %v1064
    %v1431 = vunpack.c.h.b16 %v1064
    %v1432 = vunpack.c.l.b16 %v1065
    %v1433 = vunpack.c.h.b16 %v1065
    %v1434 = vunpack.c.l.b16 %v1066
    %v1435 = vunpack.c.h.b16 %v1066
    %v1436 = vunpack.c.l.b16 %v1067
    %v1437 = vunpack.c.h.b16 %v1067
    %v1438 = vunpack.c.l.b16 %v1068
    %v1439 = vunpack.c.h.b16 %v1068
    %v1440 = vunpack.c.l.b16 %v1069
    %v1441 = vunpack.c.h.b16 %v1069
    %v1442 = vunpack.c.l.b16 %v1070
    %v1443 = vunpack.c.h.b16 %v1070
    %v1444 = vunpack.c.l.b16 %v1071
    %v1445 = vunpack.c.h.b16 %v1071
    %v1446 = vunpack.c.l.b16 %v1072
    %v1447 = vunpack.c.h.b16 %v1072
    %v1448 = vunpack.c.l.b16 %v1073
    %v1449 = vunpack.c.h.b16 %v1073
    %v1450 = vunpack.c.l.b16 %v1074
    %v1451 = vunpack.c.h.b16 %v1074
    %v1452 = vunpack.c.l.b16 %v1075
    %v1453 = vunpack.c.h.b16 %v1075
    %v1454 = vunpack.c.l.b16 %v1076
    %v1455 = vunpack.c.h.b16 %v1076
    %v1456 = vunpack.c.l.b16 %v1077
    %v1457 = vunpack.c.h.b16 %v1077
    %v1458 = vunpack.c.l.b16 %v1078
    %v1459 = vunpack.c.h.b16 %v1078
    %v1460 = vunpack.c.l.b16 %v1079
    %v1461 = vunpack.c.h.b16 %v1079
    %v1462 = vunpack.c.l.b16 %v1080
    %v1463 = vunpack.c.h.b16 %v1080
    %v1464 = vunpack.c.l.b16 %v1081
    %v1465 = vunpack.c.h.b16 %v1081
    %v1466 = vunpack.c.l.b16 %v1082
    %v1467 = vunpack.c.h.b16 %v1082
    %v1468 = vunpack.c.l.b16 %v1083
    %v1469 = vunpack.c.h.b16 %v1083
    %v1470 = vunpack.c.l.b16 %v1084
    %v1471 = vunpack.c.h.b16 %v1084
    %v1472 = vunpack.c.l.b16 %v1085
    %v1473 = vunpack.c.h.b16 %v1085
    %v1474 = vunpack.c.l.b16 %v1086
    %v1475 = vunpack.c.h.b16 %v1086
    %v1476 = vunpack.c.l.b16 %v1087
    %v1477 = vunpack.c.h.b16 %v1087
    %v1478 = vunpack.c.l.b16 %v1088
    %v1479 = vunpack.c.h.b16 %v1088
    %v1480 = vunpack.c.l.b16 %v1089
    %v1481 = vunpack.c.h.b16 %v1089
    %v1482 = vunpack.c.l.b16 %v1090
    %v1483 = vunpack.c.h.b16 %v1090
    %v1484 = vunpack.c.l.b16 %v1091
    %v1485 = vunpack.c.h.b16 %v1091
    %v1486 = vpack.c.b16 %v1234, %v1230
    %v1487 = vpack.c.b16 %v1235, %v1231
    %v1488 = vpack.c.b16 %v1236, %v1232
    %v1489 = vpack.c.b16 %v1237, %v1233
    %v1490 = vpack.c.b16 %v1242, %v1238
    %v1491 = vpack.c.b16 %v1243, %v1239
    %v1492 = vpack.c.b16 %v1244, %v1240
    %v1493 = vpack.c.b16 %v1245, %v1241
    %v1494 = vpack.c.b16 %v1250, %v1246
    %v1495 = vpack.c.b16 %v1251, %v1247
    %v1496 = vpack.c.b16 %v1252, %v1248
    %v1497 = vpack.c.b16 %v1253, %v1249
    %v1498 = vpack.c.b16 %v1258, %v1254
    %v1499 = vpack.c.b16 %v1259, %v1255
    %v1500 = vpack.c.b16 %v1260, %v1256
    %v1501 = vpack.c.b16 %v1261, %v1257
    %v1502 = vpack.c.b16 %v1266, %v1262
    %v1503 = vpack.c.b16 %v1267, %v1263
    %v1504 = vpack.c.b16 %v1268, %v1264
    %v1505 = vpack.c.b16 %v1269, %v1265
    %v1506 = vpack.c.b16 %v1274, %v1270
    %v1507 = vpack.c.b16 %v1275, %v1271
    %v1508 = vpack.c.b16 %v1276, %v1272
    %v1509 = vpack.c.b16 %v1277, %v1273
    %v1510 = vpack.c.b16 %v1282, %v1278
    %v1511 = vpack.c.b16 %v1283, %v1279
    %v1512 = vpack.c.b16 %v1284, %v1280
    %v1513 = vpack.c.b16 %v1285, %v1281
    %v1514 = vpack.c.b16 %v1290, %v1286
    %v1515 = vpack.c.b16 %v1291, %v1287
    %v1516 = vpack.c.b16 %v1292, %v1288
    %v1517 = vpack.c.b16 %v1293, %v1289
    %v1518 = vpack.c.b16 %v1298, %v1294
    %v1519 = vpack.c.b16 %v1299, %v1295
    %v1520 = vpack.c.b16 %v1300, %v1296
    %v1521 = vpack.c.b16 %v1301, %v1297
    %v1522 = vpack.c.b16 %v1306, %v1302
    %v1523 = vpack.c.b16 %v1307, %v1303
    %v1524 = vpack.c.b16 %v1308, %v1304
    %v1525 = vpack.c.b16 %v1309, %v1305
    %v1526 = vpack.c.b16 %v1314, %v1310
    %v1527 = vpack.c.b16 %v1315, %v1311
    %v1528 = vpack.c.b16 %v1316, %v1312
    %v1529 = vpack.c.b16 %v1317, %v1313
    %v1530 = vpack.c.b16 %v1322, %v1318
    %v1531 = vpack.c.b16 %v1323, %v1319
    %v1532 = vpack.c.b16 %v1324, %v1320
    %v1533 = vpack.c.b16 %v1325, %v1321
    %v1534 = vpack.c.b16 %v1330, %v1326
    %v1535 = vpack.c.b16 %v1331, %v1327
    %v1536 = vpack.c.b16 %v1332, %v1328
    %v1537 = vpack.c.b16 %v1333, %v1329
    %v1538 = vpack.c.b16 %v1338, %v1334
    %v1539 = vpack.c.b16 %v1339, %v1335
    %v1540 = vpack.c.b16 %v1340, %v1336
    %v1541 = vpack.c.b16 %v1341, %v1337
    %v1542 = vpack.c.b16 %v1346, %v1342
    %v1543 = vpack.c.b16 %v1347, %v1343
    %v1544 = vpack.c.b16 %v1348, %v1344
    %v1545 = vpack.c.b16 %v1349, %v1345
    %v1546 = vpack.c.b16 %v1354, %v1350
    %v1547 = vpack.c.b16 %v1355, %v1351
    %v1548 = vpack.c.b16 %v1356, %v1352
    %v1549 = vpack.c.b16 %v1357, %v1353
    %v1550 = vpack.c.b16 %v1362, %v1358
    %v1551 = vpack.c.b16 %v1363, %v1359
    %v1552 = vpack.c.b16 %v1364, %v1360
    %v1553 = vpack.c.b16 %v1365, %v1361
    %v1554 = vpack.c.b16 %v1370, %v1366
    %v1555 = vpack.c.b16 %v1371, %v1367
    %v1556 = vpack.c.b16 %v1372, %v1368
    %v1557 = vpack.c.b16 %v1373, %v1369
    %v1558 = vpack.c.b16 %v1378, %v1374
    %v1559 = vpack.c.b16 %v1379, %v1375
    %v1560 = vpack.c.b16 %v1380, %v1376
    %v1561 = vpack.c.b16 %v1381, %v1377
    %v1562 = vpack.c.b16 %v1386, %v1382
    %v1563 = vpack.c.b16 %v1387, %v1383
    %v1564 = vpack.c.b16 %v1388, %v1384
    %v1565 = vpack.c.b16 %v1389, %v1385
    %v1566 = vpack.c.b16 %v1394, %v1390
    %v1567 = vpack.c.b16 %v1395, %v1391
    %v1568 = vpack.c.b16 %v1396, %v1392
    %v1569 = vpack.c.b16 %v1397, %v1393
    %v1570 = vpack.c.b16 %v1402, %v1398
    %v1571 = vpack.c.b16 %v1403, %v1399
    %v1572 = vpack.c.b16 %v1404, %v1400
    %v1573 = vpack.c.b16 %v1405, %v1401
    %v1574 = vpack.c.b16 %v1410, %v1406
    %v1575 = vpack.c.b16 %v1411, %v1407
    %v1576 = vpack.c.b16 %v1412, %v1408
    %v1577 = vpack.c.b16 %v1413, %v1409
    %v1578 = vpack.c.b16 %v1418, %v1414
    %v1579 = vpack.c.b16 %v1419, %v1415
    %v1580 = vpack.c.b16 %v1420, %v1416
    %v1581 = vpack.c.b16 %v1421, %v1417
    %v1582 = vpack.c.b16 %v1426, %v1422
    %v1583 = vpack.c.b16 %v1427, %v1423
    %v1584 = vpack.c.b16 %v1428, %v1424
    %v1585 = vpack.c.b16 %v1429, %v1425
    %v1586 = vpack.c.b16 %v1434, %v1430
    %v1587 = vpack.c.b16 %v1435, %v1431
    %v1588 = vpack.c.b16 %v1436, %v1432
    %v1589 = vpack.c.b16 %v1437, %v1433
    %v1590 = vpack.c.b16 %v1442, %v1438
    %v1591 = vpack.c.b16 %v1443, %v1439
    %v1592 = vpack.c.b16 %v1444, %v1440
    %v1593 = vpack.c.b16 %v1445, %v1441
    %v1594 = vpack.c.b16 %v1450, %v1446
    %v1595 = vpack.c.b16 %v1451, %v1447
    %v1596 = vpack.c.b16 %v1452, %v1448
    %v1597 = vpack.c.b16 %v1453, %v1449
    %v1598 = vpack.c.b16 %v1458, %v1454
    %v1599 = vpack.c.b16 %v1459, %v1455
    %v1600 = vpack.c.b16 %v1460, %v1456
    %v1601 = vpack.c.b16 %v1461, %v1457
    %v1602 = vpack.c.b16 %v1466, %v1462
    %v1603 = vpack.c.b16 %v1467, %v1463
    %v1604 = vpack.c.b16 %v1468, %v1464
    %v1605 = vpack.c.b16 %v1469, %v1465
    %v1606 = vpack.c.b16 %v1474, %v1470
    %v1607 = vpack.c.b16 %v1475, %v1471
    %v1608 = vpack.c.b16 %v1476, %v1472
    %v1609 = vpack.c.b16 %v1477, %v1473
    %v1610 = vpack.c.b16 %v1482, %v1478
    %v1611 = vpack.c.b16 %v1483, %v1479
    %v1612 = vpack.c.b16 %v1484, %v1480
    %v1613 = vpack.c.b16 %v1485, %v1481
    %1742 = vmatpush.bf16.msra.mxu0 %v1514
    %1743 = vmatpush.bf16.msra.mxu0 %v1510
    %1744 = vmatpush.bf16.msra.mxu0 %v1506
    %1745 = vmatpush.bf16.msra.mxu0 %v1502
    %1746 = vmatpush.bf16.msra.mxu0 %v1498
    %1747 = vmatpush.bf16.msra.mxu0 %v1494
    %1748 = vmatpush.bf16.msra.mxu0 %v1490
    %1749 = vmatpush.bf16.msra.mxu0 %v1486
    %1750 = vmatmul.bf16.gmra.mxu0 %v960
    %v1751 = vpop.f32.mrf.mxu0
    %v1752 = vadd.f32 %v1094, %v1751
    %v1753 = vpop.f32.mrf.mxu0
    %1754 = vdwg.mxu0
    %1755 = vmatpush.bf16.msra.mxu0 %v1546
    %1756 = vmatpush.bf16.msra.mxu0 %v1542
    %1757 = vmatpush.bf16.msra.mxu0 %v1538
    %1758 = vmatpush.bf16.msra.mxu0 %v1534
    %1759 = vmatpush.bf16.msra.mxu0 %v1530
    %1760 = vmatpush.bf16.msra.mxu0 %v1526
    %1761 = vmatpush.bf16.msra.mxu0 %v1522
    %1762 = vmatpush.bf16.msra.mxu0 %v1518
    %1763 = vmatmul.bf16.gmra.mxu0 %v961
    %v1764 = vpop.f32.mrf.mxu0
    %v1765 = vadd.f32 %v1752, %v1764
    %v1766 = vpop.f32.mrf.mxu0
    %1767 = vdwg.mxu0
    %1768 = vmatpush.bf16.msra.mxu0 %v1578
    %1769 = vmatpush.bf16.msra.mxu0 %v1574
    %1770 = vmatpush.bf16.msra.mxu0 %v1570
    %1771 = vmatpush.bf16.msra.mxu0 %v1566
    %1772 = vmatpush.bf16.msra.mxu0 %v1562
    %1773 = vmatpush.bf16.msra.mxu0 %v1558
    %1774 = vmatpush.bf16.msra.mxu0 %v1554
    %1775 = vmatpush.bf16.msra.mxu0 %v1550
    %1776 = vmatmul.bf16.gmra.mxu0 %v962
    %v1777 = vpop.f32.mrf.mxu0
    %v1778 = vadd.f32 %v1765, %v1777
    %v1779 = vpop.f32.mrf.mxu0
    %1780 = vdwg.mxu0
    %1781 = vmatpush.bf16.msra.mxu0 %v1610
    %1782 = vmatpush.bf16.msra.mxu0 %v1606
    %1783 = vmatpush.bf16.msra.mxu0 %v1602
    %1784 = vmatpush.bf16.msra.mxu0 %v1598
    %1785 = vmatpush.bf16.msra.mxu0 %v1594
    %1786 = vmatpush.bf16.msra.mxu0 %v1590
    %1787 = vmatpush.bf16.msra.mxu0 %v1586
    %1788 = vmatpush.bf16.msra.mxu0 %v1582
    %1789 = vmatmul.bf16.gmra.mxu0 %v963
    %v1790 = vpop.f32.mrf.mxu0
    %v1791 = vadd.f32 %v1778, %v1790
    %v1792 = vpop.f32.mrf.mxu0
    %1793 = vdwg.mxu0
    %1794 = vmatpush.bf16.msra.mxu0 %v1515
    %1795 = vmatpush.bf16.msra.mxu0 %v1511
    %1796 = vmatpush.bf16.msra.mxu0 %v1507
    %1797 = vmatpush.bf16.msra.mxu0 %v1503
    %1798 = vmatpush.bf16.msra.mxu0 %v1499
    %1799 = vmatpush.bf16.msra.mxu0 %v1495
    %1800 = vmatpush.bf16.msra.mxu0 %v1491
    %1801 = vmatpush.bf16.msra.mxu0 %v1487
    %1802 = vmatmul.bf16.gmra.mxu0 %v960
    %v1803 = vpop.f32.mrf.mxu0
    %v1804 = vadd.f32 %v1095, %v1803
    %v1805 = vpop.f32.mrf.mxu0
    %1806 = vdwg.mxu0
    %1807 = vmatpush.bf16.msra.mxu0 %v1547
    %1808 = vmatpush.bf16.msra.mxu0 %v1543
    %1809 = vmatpush.bf16.msra.mxu0 %v1539
    %1810 = vmatpush.bf16.msra.mxu0 %v1535
    %1811 = vmatpush.bf16.msra.mxu0 %v1531
    %1812 = vmatpush.bf16.msra.mxu0 %v1527
    %1813 = vmatpush.bf16.msra.mxu0 %v1523
    %1814 = vmatpush.bf16.msra.mxu0 %v1519
    %1815 = vmatmul.bf16.gmra.mxu0 %v961
    %v1816 = vpop.f32.mrf.mxu0
    %v1817 = vadd.f32 %v1804, %v1816
    %v1818 = vpop.f32.mrf.mxu0
    %1819 = vdwg.mxu0
    %1820 = vmatpush.bf16.msra.mxu0 %v1579
    %1821 = vmatpush.bf16.msra.mxu0 %v1575
    %1822 = vmatpush.bf16.msra.mxu0 %v1571
    %1823 = vmatpush.bf16.msra.mxu0 %v1567
    %1824 = vmatpush.bf16.msra.mxu0 %v1563
    %1825 = vmatpush.bf16.msra.mxu0 %v1559
    %1826 = vmatpush.bf16.msra.mxu0 %v1555
    %1827 = vmatpush.bf16.msra.mxu0 %v1551
    %1828 = vmatmul.bf16.gmra.mxu0 %v962
    %v1829 = vpop.f32.mrf.mxu0
    %v1830 = vadd.f32 %v1817, %v1829
    %v1831 = vpop.f32.mrf.mxu0
    %1832 = vdwg.mxu0
    %1833 = vmatpush.bf16.msra.mxu0 %v1611
    %1834 = vmatpush.bf16.msra.mxu0 %v1607
    %1835 = vmatpush.bf16.msra.mxu0 %v1603
    %1836 = vmatpush.bf16.msra.mxu0 %v1599
    %1837 = vmatpush.bf16.msra.mxu0 %v1595
    %1838 = vmatpush.bf16.msra.mxu0 %v1591
    %1839 = vmatpush.bf16.msra.mxu0 %v1587
    %1840 = vmatpush.bf16.msra.mxu0 %v1583
    %1841 = vmatmul.bf16.gmra.mxu0 %v963
    %v1842 = vpop.f32.mrf.mxu0
    %v1843 = vadd.f32 %v1830, %v1842
    %v1844 = vpop.f32.mrf.mxu0
    %1845 = vdwg.mxu0
    %1846 = vmatpush.bf16.msra.mxu0 %v1516
    %1847 = vmatpush.bf16.msra.mxu0 %v1512
    %1848 = vmatpush.bf16.msra.mxu0 %v1508
    %1849 = vmatpush.bf16.msra.mxu0 %v1504
    %1850 = vmatpush.bf16.msra.mxu0 %v1500
    %1851 = vmatpush.bf16.msra.mxu0 %v1496
    %1852 = vmatpush.bf16.msra.mxu0 %v1492
    %1853 = vmatpush.bf16.msra.mxu0 %v1488
    %1854 = vmatmul.bf16.gmra.mxu0 %v960
    %v1855 = vpop.f32.mrf.mxu0
    %v1856 = vadd.f32 %v1096, %v1855
    %v1857 = vpop.f32.mrf.mxu0
    %1858 = vdwg.mxu0
    %1859 = vmatpush.bf16.msra.mxu0 %v1548
    %1860 = vmatpush.bf16.msra.mxu0 %v1544
    %1861 = vmatpush.bf16.msra.mxu0 %v1540
    %1862 = vmatpush.bf16.msra.mxu0 %v1536
    %1863 = vmatpush.bf16.msra.mxu0 %v1532
    %1864 = vmatpush.bf16.msra.mxu0 %v1528
    %1865 = vmatpush.bf16.msra.mxu0 %v1524
    %1866 = vmatpush.bf16.msra.mxu0 %v1520
    %1867 = vmatmul.bf16.gmra.mxu0 %v961
    %v1868 = vpop.f32.mrf.mxu0
    %v1869 = vadd.f32 %v1856, %v1868
    %v1870 = vpop.f32.mrf.mxu0
    %1871 = vdwg.mxu0
    %1872 = vmatpush.bf16.msra.mxu0 %v1580
    %1873 = vmatpush.bf16.msra.mxu0 %v1576
    %1874 = vmatpush.bf16.msra.mxu0 %v1572
    %1875 = vmatpush.bf16.msra.mxu0 %v1568
    %1876 = vmatpush.bf16.msra.mxu0 %v1564
    %1877 = vmatpush.bf16.msra.mxu0 %v1560
    %1878 = vmatpush.bf16.msra.mxu0 %v1556
    %1879 = vmatpush.bf16.msra.mxu0 %v1552
    %1880 = vmatmul.bf16.gmra.mxu0 %v962
    %v1881 = vpop.f32.mrf.mxu0
    %v1882 = vadd.f32 %v1869, %v1881
    %v1883 = vpop.f32.mrf.mxu0
    %1884 = vdwg.mxu0
    %1885 = vmatpush.bf16.msra.mxu0 %v1612
    %1886 = vmatpush.bf16.msra.mxu0 %v1608
    %1887 = vmatpush.bf16.msra.mxu0 %v1604
    %1888 = vmatpush.bf16.msra.mxu0 %v1600
    %1889 = vmatpush.bf16.msra.mxu0 %v1596
    %1890 = vmatpush.bf16.msra.mxu0 %v1592
    %1891 = vmatpush.bf16.msra.mxu0 %v1588
    %1892 = vmatpush.bf16.msra.mxu0 %v1584
    %1893 = vmatmul.bf16.gmra.mxu0 %v963
    %v1894 = vpop.f32.mrf.mxu0
    %v1895 = vadd.f32 %v1882, %v1894
    %v1896 = vpop.f32.mrf.mxu0
    %1897 = vdwg.mxu0
    %1898 = vmatpush.bf16.msra.mxu0 %v1517
    %1899 = vmatpush.bf16.msra.mxu0 %v1513
    %1900 = vmatpush.bf16.msra.mxu0 %v1509
    %1901 = vmatpush.bf16.msra.mxu0 %v1505
    %1902 = vmatpush.bf16.msra.mxu0 %v1501
    %1903 = vmatpush.bf16.msra.mxu0 %v1497
    %1904 = vmatpush.bf16.msra.mxu0 %v1493
    %1905 = vmatpush.bf16.msra.mxu0 %v1489
    %1906 = vmatmul.bf16.gmra.mxu0 %v960
    %v1907 = vpop.f32.mrf.mxu0
    %v1908 = vadd.f32 %v1097, %v1907
    %v1909 = vpop.f32.mrf.mxu0
    %1910 = vdwg.mxu0
    %1911 = vmatpush.bf16.msra.mxu0 %v1549
    %1912 = vmatpush.bf16.msra.mxu0 %v1545
    %1913 = vmatpush.bf16.msra.mxu0 %v1541
    %1914 = vmatpush.bf16.msra.mxu0 %v1537
    %1915 = vmatpush.bf16.msra.mxu0 %v1533
    %1916 = vmatpush.bf16.msra.mxu0 %v1529
    %1917 = vmatpush.bf16.msra.mxu0 %v1525
    %1918 = vmatpush.bf16.msra.mxu0 %v1521
    %1919 = vmatmul.bf16.gmra.mxu0 %v961
    %v1920 = vpop.f32.mrf.mxu0
    %v1921 = vadd.f32 %v1908, %v1920
    %v1922 = vpop.f32.mrf.mxu0
    %1923 = vdwg.mxu0
    %1924 = vmatpush.bf16.msra.mxu0 %v1581
    %1925 = vmatpush.bf16.msra.mxu0 %v1577
    %1926 = vmatpush.bf16.msra.mxu0 %v1573
    %1927 = vmatpush.bf16.msra.mxu0 %v1569
    %1928 = vmatpush.bf16.msra.mxu0 %v1565
    %1929 = vmatpush.bf16.msra.mxu0 %v1561
    %1930 = vmatpush.bf16.msra.mxu0 %v1557
    %1931 = vmatpush.bf16.msra.mxu0 %v1553
    %1932 = vmatmul.bf16.gmra.mxu0 %v962
    %v1933 = vpop.f32.mrf.mxu0
    %v1934 = vadd.f32 %v1921, %v1933
    %v1935 = vpop.f32.mrf.mxu0
    %1936 = vdwg.mxu0
    %1937 = vmatpush.bf16.msra.mxu0 %v1613
    %1938 = vmatpush.bf16.msra.mxu0 %v1609
    %1939 = vmatpush.bf16.msra.mxu0 %v1605
    %1940 = vmatpush.bf16.msra.mxu0 %v1601
    %1941 = vmatpush.bf16.msra.mxu0 %v1597
    %1942 = vmatpush.bf16.msra.mxu0 %v1593
    %1943 = vmatpush.bf16.msra.mxu0 %v1589
    %1944 = vmatpush.bf16.msra.mxu0 %v1585
    %1945 = vmatmul.bf16.gmra.mxu0 %v963
    %v1946 = vpop.f32.mrf.mxu0
    %v1947 = vadd.f32 %v1934, %v1946
    %v1948 = vpop.f32.mrf.mxu0
    %1949 = vdwg.mxu0
    %v1950 = vmax.f32 %v1791, 0.0
    %v1951 = vmax.f32 %v1843, 0.0
    %v1952 = vmax.f32 %v1895, 0.0
    %v1953 = vmax.f32 %v1947, 0.0
    %v1954 = vld [vmem:[%s7] sm:$0xff]
    %v1955 = vld [vmem:[%s7 + $0x8] sm:$0xff]
    %v1956 = vld [vmem:[%s7 + $0x10] sm:$0xff]
    %v1957 = vld [vmem:[%s7 + $0x18] sm:$0xff]
    %v1958 = vld [vmem:[%s7 + $0x20] sm:$0xff]
    %v1959 = vld [vmem:[%s7 + $0x28] sm:$0xff]
    %v1960 = vld [vmem:[%s7 + $0x30] sm:$0xff]
    %v1961 = vld [vmem:[%s7 + $0x38] sm:$0xff]
    %v1962 = vld [vmem:[%s7 + $0x40] sm:$0xff]
    %v1963 = vld [vmem:[%s7 + $0x48] sm:$0xff]
    %v1964 = vld [vmem:[%s7 + $0x50] sm:$0xff]
    %v1965 = vld [vmem:[%s7 + $0x58] sm:$0xff]
    %v1966 = vld [vmem:[%s7 + $0x60] sm:$0xff]
    %v1967 = vld [vmem:[%s7 + $0x68] sm:$0xff]
    %v1968 = vld [vmem:[%s7 + $0x70] sm:$0xff]
    %v1969 = vld [vmem:[%s7 + $0x78] sm:$0xff]
    %v1970 = vld [vmem:[%s7 + $0x80] sm:$0xff]
    %v1971 = vld [vmem:[%s7 + $0x88] sm:$0xff]
    %v1972 = vld [vmem:[%s7 + $0x90] sm:$0xff]
    %v1973 = vld [vmem:[%s7 + $0x98] sm:$0xff]
    %v1974 = vld [vmem:[%s7 + $0xa0] sm:$0xff]
    %v1975 = vld [vmem:[%s7 + $0xa8] sm:$0xff]
    %v1976 = vld [vmem:[%s7 + $0xb0] sm:$0xff]
    %v1977 = vld [vmem:[%s7 + $0xb8] sm:$0xff]
    %v1978 = vld [vmem:[%s7 + $0xc0] sm:$0xff]
    %v1979 = vld [vmem:[%s7 + $0xc8] sm:$0xff]
    %v1980 = vld [vmem:[%s7 + $0xd0] sm:$0xff]
    %v1981 = vld [vmem:[%s7 + $0xd8] sm:$0xff]
    %v1982 = vld [vmem:[%s7 + $0xe0] sm:$0xff]
    %v1983 = vld [vmem:[%s7 + $0xe8] sm:$0xff]
    %v1984 = vld [vmem:[%s7 + $0xf0] sm:$0xff]
    %v1985 = vld [vmem:[%s7 + $0xf8] sm:$0xff]
    %v1986 = vld [vmem:[%s7 + $0x100] sm:$0xff]
    %v1987 = vld [vmem:[%s7 + $0x108] sm:$0xff]
    %v1988 = vld [vmem:[%s7 + $0x110] sm:$0xff]
    %v1989 = vld [vmem:[%s7 + $0x118] sm:$0xff]
    %v1990 = vld [vmem:[%s7 + $0x120] sm:$0xff]
    %v1991 = vld [vmem:[%s7 + $0x128] sm:$0xff]
    %v1992 = vld [vmem:[%s7 + $0x130] sm:$0xff]
    %v1993 = vld [vmem:[%s7 + $0x138] sm:$0xff]
    %v1994 = vld [vmem:[%s7 + $0x140] sm:$0xff]
    %v1995 = vld [vmem:[%s7 + $0x148] sm:$0xff]
    %v1996 = vld [vmem:[%s7 + $0x150] sm:$0xff]
    %v1997 = vld [vmem:[%s7 + $0x158] sm:$0xff]
    %v1998 = vld [vmem:[%s7 + $0x160] sm:$0xff]
    %v1999 = vld [vmem:[%s7 + $0x168] sm:$0xff]
    %v2000 = vld [vmem:[%s7 + $0x170] sm:$0xff]
    %v2001 = vld [vmem:[%s7 + $0x178] sm:$0xff]
    %v2002 = vld [vmem:[%s7 + $0x180] sm:$0xff]
    %v2003 = vld [vmem:[%s7 + $0x188] sm:$0xff]
    %v2004 = vld [vmem:[%s7 + $0x190] sm:$0xff]
    %v2005 = vld [vmem:[%s7 + $0x198] sm:$0xff]
    %v2006 = vld [vmem:[%s7 + $0x1a0] sm:$0xff]
    %v2007 = vld [vmem:[%s7 + $0x1a8] sm:$0xff]
    %v2008 = vld [vmem:[%s7 + $0x1b0] sm:$0xff]
    %v2009 = vld [vmem:[%s7 + $0x1b8] sm:$0xff]
    %v2010 = vld [vmem:[%s7 + $0x1c0] sm:$0xff]
    %v2011 = vld [vmem:[%s7 + $0x1c8] sm:$0xff]
    %v2012 = vld [vmem:[%s7 + $0x1d0] sm:$0xff]
    %v2013 = vld [vmem:[%s7 + $0x1d8] sm:$0xff]
    %v2014 = vld [vmem:[%s7 + $0x1e0] sm:$0xff]
    %v2015 = vld [vmem:[%s7 + $0x1e8] sm:$0xff]
    %v2016 = vld [vmem:[%s7 + $0x1f0] sm:$0xff]
    %v2017 = vld [vmem:[%s7 + $0x1f8] sm:$0xff]
    %v2018 = vld [vmem:[%s8] sm:$0x1]
    %v2020 = vperm.slane %v2018, 0
    %2022 = vmatpush.msra.mxu0 %v1969
    %2023 = vmatpush.msra.mxu0 %v1968
    %2024 = vmatpush.msra.mxu0 %v1967
    %2025 = vmatpush.msra.mxu0 %v1966
    %2026 = vmatpush.msra.mxu0 %v1965
    %2027 = vmatpush.msra.mxu0 %v1964
    %2028 = vmatpush.msra.mxu0 %v1963
    %2029 = vmatpush.msra.mxu0 %v1962
    %2030 = vmatpush.msra.mxu0 %v1961
    %2031 = vmatpush.msra.mxu0 %v1960
    %2032 = vmatpush.msra.mxu0 %v1959
    %2033 = vmatpush.msra.mxu0 %v1958
    %2034 = vmatpush.msra.mxu0 %v1957
    %2035 = vmatpush.msra.mxu0 %v1956
    %2036 = vmatpush.msra.mxu0 %v1955
    %2037 = vmatpush.msra.mxu0 %v1954
    %2038 = vmatmul.f32.gmra.mxu0 %v1950
    %v2039 = vpop.f32.mrf.mxu0
    %v2040 = vadd.f32 %v2020, %v2039
    %2041 = vdwg.mxu0
    %2042 = vmatpush.msra.mxu0 %v1985
    %2043 = vmatpush.msra.mxu0 %v1984
    %2044 = vmatpush.msra.mxu0 %v1983
    %2045 = vmatpush.msra.mxu0 %v1982
    %2046 = vmatpush.msra.mxu0 %v1981
    %2047 = vmatpush.msra.mxu0 %v1980
    %2048 = vmatpush.msra.mxu0 %v1979
    %2049 = vmatpush.msra.mxu0 %v1978
    %2050 = vmatpush.msra.mxu0 %v1977
    %2051 = vmatpush.msra.mxu0 %v1976
    %2052 = vmatpush.msra.mxu0 %v1975
    %2053 = vmatpush.msra.mxu0 %v1974
    %2054 = vmatpush.msra.mxu0 %v1973
    %2055 = vmatpush.msra.mxu0 %v1972
    %2056 = vmatpush.msra.mxu0 %v1971
    %2057 = vmatpush.msra.mxu0 %v1970
    %2058 = vmatmul.f32.gmra.mxu0 %v1951
    %v2059 = vpop.f32.mrf.mxu0
    %v2060 = vadd.f32 %v2040, %v2059
    %2061 = vdwg.mxu0
    %2062 = vmatpush.msra.mxu0 %v2001
    %2063 = vmatpush.msra.mxu0 %v2000
    %2064 = vmatpush.msra.mxu0 %v1999
    %2065 = vmatpush.msra.mxu0 %v1998
    %2066 = vmatpush.msra.mxu0 %v1997
    %2067 = vmatpush.msra.mxu0 %v1996
    %2068 = vmatpush.msra.mxu0 %v1995
    %2069 = vmatpush.msra.mxu0 %v1994
    %2070 = vmatpush.msra.mxu0 %v1993
    %2071 = vmatpush.msra.mxu0 %v1992
    %2072 = vmatpush.msra.mxu0 %v1991
    %2073 = vmatpush.msra.mxu0 %v1990
    %2074 = vmatpush.msra.mxu0 %v1989
    %2075 = vmatpush.msra.mxu0 %v1988
    %2076 = vmatpush.msra.mxu0 %v1987
    %2077 = vmatpush.msra.mxu0 %v1986
    %2078 = vmatmul.f32.gmra.mxu0 %v1952
    %v2079 = vpop.f32.mrf.mxu0
    %v2080 = vadd.f32 %v2060, %v2079
    %2081 = vdwg.mxu0
    %2082 = vmatpush.msra.mxu0 %v2017
    %2083 = vmatpush.msra.mxu0 %v2016
    %2084 = vmatpush.msra.mxu0 %v2015
    %2085 = vmatpush.msra.mxu0 %v2014
    %2086 = vmatpush.msra.mxu0 %v2013
    %2087 = vmatpush.msra.mxu0 %v2012
    %2088 = vmatpush.msra.mxu0 %v2011
    %2089 = vmatpush.msra.mxu0 %v2010
    %2090 = vmatpush.msra.mxu0 %v2009
    %2091 = vmatpush.msra.mxu0 %v2008
    %2092 = vmatpush.msra.mxu0 %v2007
    %2093 = vmatpush.msra.mxu0 %v2006
    %2094 = vmatpush.msra.mxu0 %v2005
    %2095 = vmatpush.msra.mxu0 %v2004
    %2096 = vmatpush.msra.mxu0 %v2003
    %2097 = vmatpush.msra.mxu0 %v2002
    %2098 = vmatmul.f32.gmra.mxu0 %v1953
    %v2099 = vpop.f32.mrf.mxu0
    %v2100 = vadd.f32 %v2080, %v2099
    %2101 = vdwg.mxu0
    %vm2102 = vcmask 74752
    %v2103 = vsel %vm2102, %v2100, -inf
    %2104 = vmax.xlane.f32.xlu0 %v2103
    %v2105 = vpop.xlane.xlu0 %2104
    %v2106 = vsub.f32 %v2100, %v2105
    %v2107 = vmul.f32 %v2106, 1.442695
    %v2108 = vpow.pop %v2107
    %v2109 = vsel %vm2102, %v2108, 0.0
    %2110 = vadd.xlane.f32.xlu0 %v2109
    %v2111 = vpop.xlane.xlu0 %2110
    %v2112 = vlog2.pop %v2111
    %v2113 = vmul.f32 %v2112, 0.6931472
    %v2114 = vadd.f32 %v2113, %v2105
    %v2115 = vsub.f32 %v2100, %v2114
    %2116 = vst.msk [vmem:[#allocation9] sm:$0x3] %vm2102, %v2115
    // Predicated region
    $region42: #{net_synthetic_forward.1} parent=1 // pred_check
      _
    $region43: #{net_synthetic_forward.1} parent=1 // pred_check_branch
      %2118 = sbr.rel (0) target = $region45
    $region44: #{net_synthetic_forward.1} parent=1 // pred_region
      %2120 = vsyncadd [#allocation8], 0
      %s2122 = sshll.u32 [#allocation9], 4
      %s2123 = int_to_ptr.vmem [resolvable:$true] %s2122
      %s2124 = sshll.u32 %s9, 4
      %s2125 = int_to_ptr.hbm [resolvable:$true] %s2124
      %2127 = dma.vmem_to_hbm [thread:$0]  %s2123, 32, %s2125, [#allocation8]
    $region45: #{net_synthetic_forward.1} parent=1 // pred_fallthru
      _
    // Predicated region
    $region46: #{net_synthetic_forward.1} parent=1 // pred_check
      _
    $region47: #{net_synthetic_forward.1} parent=1 // pred_check_branch
      %2129 = sbr.rel (0) target = $region49
    $region48: #{net_synthetic_forward.1} parent=1 // pred_region
      %2131 = dma.done [#allocation8], 32
    $region49: #{net_synthetic_forward.1} parent=1 // pred_fallthru
      _
    %2132 = vsyncpa [#allocation7], 1
    %2133 = vsyncpa [#allocation8], 1

</llo_original>
